<compile_context>
chip_gen: v6e
topology: v6e:2x2x1
jax: 0.10.0
libtpu: 0.0.40
codegen_flags: <defaults>
</compile_context>

<pallas_src>
import functools

import jax
import jax.numpy as jnp
from jax.experimental import pallas as pl
from jax.experimental.pallas import tpu as pltpu

# ---------------- module hyper-parameters (match DenseWarp defaults) --------
NUM_FREQ_XYZ = 6
NUM_FREQ_T = 6
MLP_D = 6            # number of hidden linear layers
MLP_W = 256          # hidden width
SKIP = 4             # NeRF-style skip connection index
INST_CHANNELS = 32   # instance-code width used by CondMLP

POS_CH = 3 * (2 * NUM_FREQ_XYZ + 1)        # 39
T_CH = 2 * NUM_FREQ_T + 1                  # 13
IN_CH = POS_CH + T_CH + INST_CHANNELS      # 84  (MLP input channels)
CIN_PAD = 128                              # padded MLP input width (lanes)
WF_PAD = 128                               # padded final-weight output lanes
COUT = 3                                   # real output channels (xyz motion)
TM_MAX = 1024                              # max row tile (sweep 1024 vs 2048)


def _round_up(x, m):
    return ((x + m - 1) // m) * m


def _cdiv(a, b):
    return (a + b - 1) // b


def _choose_tile(P):
    """Pick the point-row tile.

    * multiple of 128 (bf16 min tile is (16,128); MXU prefers 256-row multiples)
    * >= 2 grid blocks when P is big enough so both v7x TensorCores get work
    * capped at TM_MAX so per-grid-step overhead stays a small fraction
    """
    tm = _round_up(max(P, 128), 128)
    if tm > 256:
        tm = min(TM_MAX, _round_up(_cdiv(tm, 2), 256))
    p_pad = _round_up(P, tm)
    return tm, p_pad


# ---------------------------- Pallas kernel ---------------------------------
def _cond_mlp_kernel(x_ref, res_ref, w_in_ref, w_hid_ref, b_ref, wf_ref, bf_ref,
                     o_ref):
    """One row-tile of points through the CondMLP + fused residual add.

    x_ref   : (TM, 128)     bf16  padded MLP input features
    res_ref : (TM, 3)       f32   xyz residual (exact)
    w_in_ref: (2, 128, 256) bf16  [w0, w4_x]
    w_hid_ref:(5, 256, 256) bf16  [w1, w2, w3, w4_h, w5]
    b_ref   : (6, 1, 256)   f32   [b0..b5]
    wf_ref  : (256, 128)    bf16  final weight * 0.1 (lanes 0..2 real)
    bf_ref  : (1, 128)      f32   final bias * 0.1
    o_ref   : (TM, 3)       f32   xyz + 0.1 * motion
    """
    x = x_ref[...]                                                   # bf16

    h = jnp.dot(x, w_in_ref[0], preferred_element_type=jnp.float32) + b_ref[0]
    h = jnp.maximum(h, 0.0).astype(jnp.bfloat16)

    h = jnp.dot(h, w_hid_ref[0], preferred_element_type=jnp.float32) + b_ref[1]
    h = jnp.maximum(h, 0.0).astype(jnp.bfloat16)

    h = jnp.dot(h, w_hid_ref[1], preferred_element_type=jnp.float32) + b_ref[2]
    h = jnp.maximum(h, 0.0).astype(jnp.bfloat16)

    h = jnp.dot(h, w_hid_ref[2], preferred_element_type=jnp.float32) + b_ref[3]
    h = jnp.maximum(h, 0.0).astype(jnp.bfloat16)

    # NeRF skip @ layer 4: concat([x, h]) @ w4  ==  x @ w4_x + h @ w4_h
    h = (jnp.dot(x, w_in_ref[1], preferred_element_type=jnp.float32)
         + jnp.dot(h, w_hid_ref[3], preferred_element_type=jnp.float32)
         + b_ref[4])
    h = jnp.maximum(h, 0.0).astype(jnp.bfloat16)

    h = jnp.dot(h, w_hid_ref[4], preferred_element_type=jnp.float32) + b_ref[5]
    h = jnp.maximum(h, 0.0).astype(jnp.bfloat16)

    # 0.1 scale is folded into wf/bf at prepare time; epilogue is just res + motion.
    motion = jnp.dot(h, wf_ref[...], preferred_element_type=jnp.float32) + bf_ref[...]
    o_ref[...] = res_ref[...] + motion[:, :COUT]


def prepare_cond_mlp(mlp):
    """Pad / stack / bf16-cast CondMLP weights once (hoisted out of forward).

    Also folds the DenseWarp 0.1 motion scale into the final layer.
    """
    layers = mlp["layers"]
    w0, _ = layers[0]
    w0_p = jnp.pad(w0, ((0, CIN_PAD - IN_CH), (0, 0)))               # (128, 256)
    w4, _ = layers[SKIP]
    w4_x = jnp.pad(w4[:IN_CH], ((0, CIN_PAD - IN_CH), (0, 0)))       # (128, 256)
    w4_h = w4[IN_CH:]                                                # (256, 256)

    w_in = jnp.stack([w0_p, w4_x]).astype(jnp.bfloat16)              # (2,128,256)
    w_hid = jnp.stack([layers[1][0], layers[2][0], layers[3][0],
                       w4_h, layers[5][0]]).astype(jnp.bfloat16)     # (5,256,256)
    biases = jnp.stack([layers[i][1][None, :] for i in range(MLP_D)])  # (6,1,256) f32

    wf, bf = mlp["final"]
    wf_p = jnp.pad(wf * 0.1, ((0, 0), (0, WF_PAD - COUT))).astype(jnp.bfloat16)  # (256,128)
    bf_p = jnp.pad(bf * 0.1, (0, WF_PAD - COUT))[None, :]                        # (1,128) f32

    return {"w_in": w_in, "w_hid": w_hid, "b": biases, "wf": wf_p, "bf": bf_p,
            "inst_embedding": mlp["inst_embedding"]}


def cond_mlp_warp_pallas(xyz_embed, t_embed, inst_code, xyz_flat, wp):
    """Inputs are the (P, ...) f32 embedding pieces + raw xyz; returns (P, 3) f32."""
    P = xyz_flat.shape[0]
    tm, p_pad = _choose_tile(P)

    # One fused XLA pass: bf16 casts fold into their producers, the lane-zeros
    # block completes the 128-lane padding -> padded bf16 feature slab written once.
    x = jnp.concatenate(
        [xyz_embed.astype(jnp.bfloat16),
         t_embed.astype(jnp.bfloat16),
         inst_code.astype(jnp.bfloat16),
         jnp.zeros((P, CIN_PAD - IN_CH), jnp.bfloat16)], axis=-1)     # (P, 128) bf16
    res = xyz_flat                                                    # (P, 3) f32
    if p_pad != P:
        x = jnp.pad(x, ((0, p_pad - P), (0, 0)))
        res = jnp.pad(res, ((0, p_pad - P), (0, 0)))

    in_specs = [
        pl.BlockSpec((tm, CIN_PAD), lambda i: (i, 0)),                # features
        pl.BlockSpec((tm, COUT), lambda i: (i, 0)),                   # f32 residual
        pl.BlockSpec(wp["w_in"].shape, lambda i: (0, 0, 0)),
        pl.BlockSpec(wp["w_hid"].shape, lambda i: (0, 0, 0)),
        pl.BlockSpec(wp["b"].shape, lambda i: (0, 0, 0)),
        pl.BlockSpec(wp["wf"].shape, lambda i: (0, 0)),
        pl.BlockSpec(wp["bf"].shape, lambda i: (0, 0)),
    ]

    out = pl.pallas_call(
        _cond_mlp_kernel,
        out_shape=jax.ShapeDtypeStruct((p_pad, COUT), jnp.float32),
        grid=(p_pad // tm,),
        in_specs=in_specs,
        out_specs=pl.BlockSpec((tm, COUT), lambda i: (i, 0)),
        compiler_params=pltpu.CompilerParams(
            dimension_semantics=("parallel",),
            vmem_limit_bytes=32 * 1024 * 1024,
        ),
    )(x, res, wp["w_in"], wp["w_hid"], wp["b"], wp["wf"], wp["bf"])
    # Narrow (12 B/point) row slice only when padding was added.
    return out[:P] if p_pad != P else out


# ---------------------------- JAX-side glue ---------------------------------
def pos_embedding(x, num_freq):
    """NeRF positional embedding: [x, sin(2^k x), cos(2^k x)]."""
    outs = [x]
    for k in range(num_freq):
        f = float(2 ** k)
        outs.append(jnp.sin(x * f))
        outs.append(jnp.cos(x * f))
    return jnp.concatenate(outs, axis=-1)


def time_embedding(frame_id, tparams):
    """Normalized-time fourier embedding followed by a linear mapping."""
    denom = jnp.maximum(jnp.asarray(tparams["num_frames"], jnp.float32) - 1.0, 1.0)
    t = frame_id.astype(jnp.float32) / denom * 2.0 - 1.0                    # (M,)
    te = pos_embedding(t[:, None], NUM_FREQ_T)                              # (M, 13)
    return te @ tparams["w"] + tparams["b"]                                  # (M, 13)
# TODO(synk): lab4d's TimeEmbedding also mixes per-video latent codes; here it
# is a fourier embedding of normalized frame time followed by a linear map.


def dense_warp_forward(xyz, frame_id, inst_id, params, prepared, backward=False):
    """xyz: (M,N,D,3) -> warped xyz (M,N,D,3).  out = xyz + 0.1 * MLP(embed)."""
    M, N, D, _ = xyz.shape
    xyz_flat = xyz.reshape(-1, 3)
    xyz_embed = pos_embedding(xyz_flat, NUM_FREQ_XYZ)                        # (P, 39)
    t_embed = time_embedding(frame_id, params["time"])                       # (M, 13)
    t_embed = jnp.broadcast_to(t_embed[:, None, None, :], (M, N, D, T_CH)).reshape(-1, T_CH)
    wp = prepared["backward_map"] if backward else prepared["forward_map"]
    inst_code = wp["inst_embedding"][inst_id]                                # (M, 32)
    inst_code = jnp.broadcast_to(inst_code[:, None, None, :],
                                 (M, N, D, INST_CHANNELS)).reshape(-1, INST_CHANNELS)
    warped = cond_mlp_warp_pallas(xyz_embed, t_embed, inst_code, xyz_flat, wp)  # (P, 3)
    return warped.reshape(M, N, D, 3)


def dense_warp_reference(xyz, frame_id, inst_id, params, backward=False):
    """Pure-jnp f32 reference (unpadded weights) for correctness check."""
    M, N, D, _ = xyz.shape
    xyz_embed = pos_embedding(xyz.reshape(-1, 3), NUM_FREQ_XYZ)
    t_embed = time_embedding(frame_id, params["time"])
    t_embed = jnp.broadcast_to(t_embed[:, None, None, :], (M, N, D, T_CH)).reshape(-1, T_CH)
    mlp = params["backward_map"] if backward else params["forward_map"]
    inst_code = mlp["inst_embedding"][inst_id]
    inst_code = jnp.broadcast_to(inst_code[:, None, None, :],
                                 (M, N, D, INST_CHANNELS)).reshape(-1, INST_CHANNELS)
    feat = jnp.concatenate([xyz_embed, t_embed, inst_code], axis=-1)
    x = feat
    h = x
    for i, (w, b) in enumerate(mlp["layers"]):
        if i == SKIP:
            h = jnp.concatenate([x, h], axis=-1)
        h = jnp.maximum(h @ w + b, 0.0)
    wf, bf = mlp["final"]
    motion = (h @ wf + bf).reshape(M, N, D, 3)
    return xyz + motion * 0.1


# ---------------------------- parameter init --------------------------------
def init_cond_mlp_params(key, num_inst):
    keys = jax.random.split(key, 2 * MLP_D + 3)
    layers, ki = [], 0
    for i in range(MLP_D):
        din = IN_CH if i == 0 else (IN_CH + MLP_W if i == SKIP else MLP_W)
        w = jax.random.normal(keys[ki], (din, MLP_W), jnp.float32) / jnp.sqrt(float(din)); ki += 1
        b = jax.random.normal(keys[ki], (MLP_W,), jnp.float32) * 0.01; ki += 1
        layers.append((w, b))
    wf = jax.random.normal(keys[ki], (MLP_W, 3), jnp.float32) / jnp.sqrt(float(MLP_W)); ki += 1
    bf = jax.random.normal(keys[ki], (3,), jnp.float32) * 0.01; ki += 1
    inst = jax.random.normal(keys[ki], (num_inst, INST_CHANNELS), jnp.float32) * 0.1
    return {"layers": layers, "final": (wf, bf), "inst_embedding": inst}


def init_time_params(key, num_frames):
    k1, k2 = jax.random.split(key)
    return {"w": jax.random.normal(k1, (T_CH, T_CH), jnp.float32) / jnp.sqrt(float(T_CH)),
            "b": jax.random.normal(k2, (T_CH,), jnp.float32) * 0.01,
            "num_frames": num_frames}


# ------------------------------- main ----------------------------------------
if __name__ == "__main__":
    # frame_info like lab4d: 2 videos of 8 frames each -> num_frames=16, num_inst=2
    frame_info = {"frame_offset": [0, 8, 16]}
    num_frames = frame_info["frame_offset"][-1]
    num_inst = len(frame_info["frame_offset"]) - 1

    key = jax.random.PRNGKey(0)
    k_fwd, k_bwd, k_time, k_xyz = jax.random.split(key, 4)
    params = {
        "forward_map": init_cond_mlp_params(k_fwd, num_inst),
        "backward_map": init_cond_mlp_params(k_bwd, num_inst),
        "time": init_time_params(k_time, num_frames),
    }
    # Prepare (pad / stack / bf16-cast / 0.1-fold) CondMLP weights once, outside jit.
    prepared = {
        "forward_map": prepare_cond_mlp(params["forward_map"]),
        "backward_map": prepare_cond_mlp(params["backward_map"]),
    }
    prepared = jax.block_until_ready(prepared)

    fwd = jax.jit(functools.partial(dense_warp_forward, backward=False))

    # small shapes: M=2 ray-batches, N=4 samples, D=4 depth samples, 3 coords
    M, N, Dpts = 2, 4, 4
    xyz = jax.random.normal(k_xyz, (M, N, Dpts, 3), jnp.float32)
    frame_id = jnp.array([3, 10], dtype=jnp.int32)
    inst_id = jnp.array([0, 1], dtype=jnp.int32)

    out = fwd(xyz, frame_id, inst_id, params, prepared)
    out = jax.block_until_ready(out)

    ref = dense_warp_reference(xyz, frame_id, inst_id, params, backward=False)
    assert out.shape == xyz.shape and out.dtype == xyz.dtype
    # bf16 weights/activations inside the kernel -> loosened tolerance vs f32 ref
    assert jnp.allclose(out, ref, rtol=2e-2, atol=2e-2), "mismatch vs reference"

    print("KERNEL_OK")
</pallas_src>

<mosaic_0001>
module attributes {stable_mosaic.version = 11 : i64} {
  func.func @_cond_mlp_kernel(%arg0: i32, %arg1: memref<128x128xbf16, #tpu.memory_space<vmem>>, %arg2: memref<128x3xf32, #tpu.memory_space<vmem>>, %arg3: memref<2x128x256xbf16, #tpu.memory_space<vmem>>, %arg4: memref<5x256x256xbf16, #tpu.memory_space<vmem>>, %arg5: memref<6x1x256xf32, #tpu.memory_space<vmem>>, %arg6: memref<256x128xbf16, #tpu.memory_space<vmem>>, %arg7: memref<1x128xf32, #tpu.memory_space<vmem>>, %arg8: memref<128x3xf32, #tpu.memory_space<vmem>>) attributes {dimension_semantics = [#tpu.dimension_semantics<parallel>], iteration_bounds = array<i64: 1>, scalar_prefetch = 0 : i64, scratch_operands = 0 : i64, tpu.core_type = #tpu.core_type<tc>, window_params = [{transform_indices = @transform_0, window_bounds = array<i64: 128, 128>}, {transform_indices = @transform_1, window_bounds = array<i64: 128, 3>}, {pipeline_mode = #tpu.pipeline_mode<synchronous>, transform_indices = @transform_2, window_bounds = array<i64: 2, 128, 256>}, {pipeline_mode = #tpu.pipeline_mode<synchronous>, transform_indices = @transform_3, window_bounds = array<i64: 5, 256, 256>}, {pipeline_mode = #tpu.pipeline_mode<synchronous>, transform_indices = @transform_4, window_bounds = array<i64: 6, 1, 256>}, {pipeline_mode = #tpu.pipeline_mode<synchronous>, transform_indices = @transform_5, window_bounds = array<i64: 256, 128>}, {pipeline_mode = #tpu.pipeline_mode<synchronous>, transform_indices = @transform_6, window_bounds = array<i64: 1, 128>}, {transform_indices = @transform_7, window_bounds = array<i64: 128, 3>}]} {
    %c0 = arith.constant 0 : index
    %c0_0 = arith.constant 0 : index
    %0 = vector.load %arg1[%c0, %c0_0] : memref<128x128xbf16, #tpu.memory_space<vmem>>, vector<128x128xbf16>
    %c0_1 = arith.constant 0 : index
    %c0_2 = arith.constant 0 : index
    %c0_3 = arith.constant 0 : index
    %1 = vector.load %arg3[%c0_1, %c0_2, %c0_3] : memref<2x128x256xbf16, #tpu.memory_space<vmem>>, vector<1x128x256xbf16>
    %2 = vector.shape_cast %1 : vector<1x128x256xbf16> to vector<128x256xbf16>
    %cst = arith.constant dense<0.000000e+00> : vector<128x256xf32>
    %3 = tpu.matmul %0, %2, %cst {dimension_numbers = #tpu.dot_dimension_numbers<[1], [0], [0], [1], [0, 0, 1, 1], [], []>} : vector<128x128xbf16>, vector<128x256xbf16>, vector<128x256xf32> -> vector<128x256xf32>
    %c0_4 = arith.constant 0 : index
    %c0_5 = arith.constant 0 : index
    %c0_6 = arith.constant 0 : index
    %4 = vector.load %arg5[%c0_4, %c0_5, %c0_6] : memref<6x1x256xf32, #tpu.memory_space<vmem>>, vector<1x1x256xf32>
    %5 = vector.shape_cast %4 : vector<1x1x256xf32> to vector<1x256xf32>
    %6 = vector.broadcast %5 : vector<1x256xf32> to vector<128x256xf32>
    %7 = arith.addf %3, %6 : vector<128x256xf32>
    %cst_7 = arith.constant 0.000000e+00 : f32
    %8 = vector.broadcast %cst_7 : f32 to vector<128x256xf32>
    %9 = arith.maximumf %7, %8 : vector<128x256xf32>
    %10 = arith.truncf %9 : vector<128x256xf32> to vector<128x256xbf16>
    %c0_8 = arith.constant 0 : index
    %c0_9 = arith.constant 0 : index
    %c0_10 = arith.constant 0 : index
    %11 = vector.load %arg4[%c0_8, %c0_9, %c0_10] : memref<5x256x256xbf16, #tpu.memory_space<vmem>>, vector<1x256x256xbf16>
    %12 = vector.shape_cast %11 : vector<1x256x256xbf16> to vector<256x256xbf16>
    %cst_11 = arith.constant dense<0.000000e+00> : vector<128x256xf32>
    %13 = tpu.matmul %10, %12, %cst_11 {dimension_numbers = #tpu.dot_dimension_numbers<[1], [0], [0], [1], [0, 0, 1, 1], [], []>} : vector<128x256xbf16>, vector<256x256xbf16>, vector<128x256xf32> -> vector<128x256xf32>
    %c1 = arith.constant 1 : index
    %c0_12 = arith.constant 0 : index
    %c0_13 = arith.constant 0 : index
    %14 = vector.load %arg5[%c1, %c0_12, %c0_13] : memref<6x1x256xf32, #tpu.memory_space<vmem>>, vector<1x1x256xf32>
    %15 = vector.shape_cast %14 : vector<1x1x256xf32> to vector<1x256xf32>
    %16 = vector.broadcast %15 : vector<1x256xf32> to vector<128x256xf32>
    %17 = arith.addf %13, %16 : vector<128x256xf32>
    %cst_14 = arith.constant 0.000000e+00 : f32
    %18 = vector.broadcast %cst_14 : f32 to vector<128x256xf32>
    %19 = arith.maximumf %17, %18 : vector<128x256xf32>
    %20 = arith.truncf %19 : vector<128x256xf32> to vector<128x256xbf16>
    %c1_15 = arith.constant 1 : index
    %c0_16 = arith.constant 0 : index
    %c0_17 = arith.constant 0 : index
    %21 = vector.load %arg4[%c1_15, %c0_16, %c0_17] : memref<5x256x256xbf16, #tpu.memory_space<vmem>>, vector<1x256x256xbf16>
    %22 = vector.shape_cast %21 : vector<1x256x256xbf16> to vector<256x256xbf16>
    %cst_18 = arith.constant dense<0.000000e+00> : vector<128x256xf32>
    %23 = tpu.matmul %20, %22, %cst_18 {dimension_numbers = #tpu.dot_dimension_numbers<[1], [0], [0], [1], [0, 0, 1, 1], [], []>} : vector<128x256xbf16>, vector<256x256xbf16>, vector<128x256xf32> -> vector<128x256xf32>
    %c2 = arith.constant 2 : index
    %c0_19 = arith.constant 0 : index
    %c0_20 = arith.constant 0 : index
    %24 = vector.load %arg5[%c2, %c0_19, %c0_20] : memref<6x1x256xf32, #tpu.memory_space<vmem>>, vector<1x1x256xf32>
    %25 = vector.shape_cast %24 : vector<1x1x256xf32> to vector<1x256xf32>
    %26 = vector.broadcast %25 : vector<1x256xf32> to vector<128x256xf32>
    %27 = arith.addf %23, %26 : vector<128x256xf32>
    %cst_21 = arith.constant 0.000000e+00 : f32
    %28 = vector.broadcast %cst_21 : f32 to vector<128x256xf32>
    %29 = arith.maximumf %27, %28 : vector<128x256xf32>
    %30 = arith.truncf %29 : vector<128x256xf32> to vector<128x256xbf16>
    %c2_22 = arith.constant 2 : index
    %c0_23 = arith.constant 0 : index
    %c0_24 = arith.constant 0 : index
    %31 = vector.load %arg4[%c2_22, %c0_23, %c0_24] : memref<5x256x256xbf16, #tpu.memory_space<vmem>>, vector<1x256x256xbf16>
    %32 = vector.shape_cast %31 : vector<1x256x256xbf16> to vector<256x256xbf16>
    %cst_25 = arith.constant dense<0.000000e+00> : vector<128x256xf32>
    %33 = tpu.matmul %30, %32, %cst_25 {dimension_numbers = #tpu.dot_dimension_numbers<[1], [0], [0], [1], [0, 0, 1, 1], [], []>} : vector<128x256xbf16>, vector<256x256xbf16>, vector<128x256xf32> -> vector<128x256xf32>
    %c3 = arith.constant 3 : index
    %c0_26 = arith.constant 0 : index
    %c0_27 = arith.constant 0 : index
    %34 = vector.load %arg5[%c3, %c0_26, %c0_27] : memref<6x1x256xf32, #tpu.memory_space<vmem>>, vector<1x1x256xf32>
    %35 = vector.shape_cast %34 : vector<1x1x256xf32> to vector<1x256xf32>
    %36 = vector.broadcast %35 : vector<1x256xf32> to vector<128x256xf32>
    %37 = arith.addf %33, %36 : vector<128x256xf32>
    %cst_28 = arith.constant 0.000000e+00 : f32
    %38 = vector.broadcast %cst_28 : f32 to vector<128x256xf32>
    %39 = arith.maximumf %37, %38 : vector<128x256xf32>
    %40 = arith.truncf %39 : vector<128x256xf32> to vector<128x256xbf16>
    %c1_29 = arith.constant 1 : index
    %c0_30 = arith.constant 0 : index
    %c0_31 = arith.constant 0 : index
    %41 = vector.load %arg3[%c1_29, %c0_30, %c0_31] : memref<2x128x256xbf16, #tpu.memory_space<vmem>>, vector<1x128x256xbf16>
    %42 = vector.shape_cast %41 : vector<1x128x256xbf16> to vector<128x256xbf16>
    %cst_32 = arith.constant dense<0.000000e+00> : vector<128x256xf32>
    %43 = tpu.matmul %0, %42, %cst_32 {dimension_numbers = #tpu.dot_dimension_numbers<[1], [0], [0], [1], [0, 0, 1, 1], [], []>} : vector<128x128xbf16>, vector<128x256xbf16>, vector<128x256xf32> -> vector<128x256xf32>
    %c3_33 = arith.constant 3 : index
    %c0_34 = arith.constant 0 : index
    %c0_35 = arith.constant 0 : index
    %44 = vector.load %arg4[%c3_33, %c0_34, %c0_35] : memref<5x256x256xbf16, #tpu.memory_space<vmem>>, vector<1x256x256xbf16>
    %45 = vector.shape_cast %44 : vector<1x256x256xbf16> to vector<256x256xbf16>
    %cst_36 = arith.constant dense<0.000000e+00> : vector<128x256xf32>
    %46 = tpu.matmul %40, %45, %cst_36 {dimension_numbers = #tpu.dot_dimension_numbers<[1], [0], [0], [1], [0, 0, 1, 1], [], []>} : vector<128x256xbf16>, vector<256x256xbf16>, vector<128x256xf32> -> vector<128x256xf32>
    %47 = arith.addf %43, %46 : vector<128x256xf32>
    %c4 = arith.constant 4 : index
    %c0_37 = arith.constant 0 : index
    %c0_38 = arith.constant 0 : index
    %48 = vector.load %arg5[%c4, %c0_37, %c0_38] : memref<6x1x256xf32, #tpu.memory_space<vmem>>, vector<1x1x256xf32>
    %49 = vector.shape_cast %48 : vector<1x1x256xf32> to vector<1x256xf32>
    %50 = vector.broadcast %49 : vector<1x256xf32> to vector<128x256xf32>
    %51 = arith.addf %47, %50 : vector<128x256xf32>
    %cst_39 = arith.constant 0.000000e+00 : f32
    %52 = vector.broadcast %cst_39 : f32 to vector<128x256xf32>
    %53 = arith.maximumf %51, %52 : vector<128x256xf32>
    %54 = arith.truncf %53 : vector<128x256xf32> to vector<128x256xbf16>
    %c4_40 = arith.constant 4 : index
    %c0_41 = arith.constant 0 : index
    %c0_42 = arith.constant 0 : index
    %55 = vector.load %arg4[%c4_40, %c0_41, %c0_42] : memref<5x256x256xbf16, #tpu.memory_space<vmem>>, vector<1x256x256xbf16>
    %56 = vector.shape_cast %55 : vector<1x256x256xbf16> to vector<256x256xbf16>
    %cst_43 = arith.constant dense<0.000000e+00> : vector<128x256xf32>
    %57 = tpu.matmul %54, %56, %cst_43 {dimension_numbers = #tpu.dot_dimension_numbers<[1], [0], [0], [1], [0, 0, 1, 1], [], []>} : vector<128x256xbf16>, vector<256x256xbf16>, vector<128x256xf32> -> vector<128x256xf32>
    %c5 = arith.constant 5 : index
    %c0_44 = arith.constant 0 : index
    %c0_45 = arith.constant 0 : index
    %58 = vector.load %arg5[%c5, %c0_44, %c0_45] : memref<6x1x256xf32, #tpu.memory_space<vmem>>, vector<1x1x256xf32>
    %59 = vector.shape_cast %58 : vector<1x1x256xf32> to vector<1x256xf32>
    %60 = vector.broadcast %59 : vector<1x256xf32> to vector<128x256xf32>
    %61 = arith.addf %57, %60 : vector<128x256xf32>
    %cst_46 = arith.constant 0.000000e+00 : f32
    %62 = vector.broadcast %cst_46 : f32 to vector<128x256xf32>
    %63 = arith.maximumf %61, %62 : vector<128x256xf32>
    %64 = arith.truncf %63 : vector<128x256xf32> to vector<128x256xbf16>
    %c0_47 = arith.constant 0 : index
    %c0_48 = arith.constant 0 : index
    %65 = vector.load %arg6[%c0_47, %c0_48] : memref<256x128xbf16, #tpu.memory_space<vmem>>, vector<256x128xbf16>
    %cst_49 = arith.constant dense<0.000000e+00> : vector<128x128xf32>
    %66 = tpu.matmul %64, %65, %cst_49 {dimension_numbers = #tpu.dot_dimension_numbers<[1], [0], [0], [1], [0, 0, 1, 1], [], []>} : vector<128x256xbf16>, vector<256x128xbf16>, vector<128x128xf32> -> vector<128x128xf32>
    %c0_50 = arith.constant 0 : index
    %c0_51 = arith.constant 0 : index
    %67 = vector.load %arg7[%c0_50, %c0_51] : memref<1x128xf32, #tpu.memory_space<vmem>>, vector<1x128xf32>
    %68 = vector.broadcast %67 : vector<1x128xf32> to vector<128x128xf32>
    %69 = arith.addf %66, %68 : vector<128x128xf32>
    %c0_52 = arith.constant 0 : index
    %c0_53 = arith.constant 0 : index
    %70 = vector.load %arg2[%c0_52, %c0_53] : memref<128x3xf32, #tpu.memory_space<vmem>>, vector<128x3xf32>
    %71 = vector.extract_strided_slice %69 {offsets = [0, 0], sizes = [128, 3], strides = [1, 1]} : vector<128x128xf32> to vector<128x3xf32>
    %72 = arith.addf %70, %71 : vector<128x3xf32>
    %c0_54 = arith.constant 0 : index
    %c0_55 = arith.constant 0 : index
    %73 = vector.load %arg8[%c0_54, %c0_55] : memref<128x3xf32, #tpu.memory_space<vmem>>, vector<128x3xf32>
    tpu.vector_store %arg8[%c0_54, %c0_55], %72 {strides = array<i32>} : memref<128x3xf32, #tpu.memory_space<vmem>>, vector<128x3xf32>,
    return
  }
  func.func @transform_0(%arg0: i32) -> (i32, i32) {
    %c0_i32 = arith.constant 0 : i32
    %c0_i32_0 = arith.constant 0 : i32
    return %arg0, %c0_i32 : i32, i32
  }
  func.func @transform_1(%arg0: i32) -> (i32, i32) {
    %c0_i32 = arith.constant 0 : i32
    %c0_i32_0 = arith.constant 0 : i32
    return %arg0, %c0_i32 : i32, i32
  }
  func.func @transform_2(%arg0: i32) -> (i32, i32, i32) {
    %c0_i32 = arith.constant 0 : i32
    %c0_i32_0 = arith.constant 0 : i32
    %c0_i32_1 = arith.constant 0 : i32
    %c0_i32_2 = arith.constant 0 : i32
    return %c0_i32, %c0_i32_0, %c0_i32_1 : i32, i32, i32
  }
  func.func @transform_3(%arg0: i32) -> (i32, i32, i32) {
    %c0_i32 = arith.constant 0 : i32
    %c0_i32_0 = arith.constant 0 : i32
    %c0_i32_1 = arith.constant 0 : i32
    %c0_i32_2 = arith.constant 0 : i32
    return %c0_i32, %c0_i32_0, %c0_i32_1 : i32, i32, i32
  }
  func.func @transform_4(%arg0: i32) -> (i32, i32, i32) {
    %c0_i32 = arith.constant 0 : i32
    %c0_i32_0 = arith.constant 0 : i32
    %c0_i32_1 = arith.constant 0 : i32
    %c0_i32_2 = arith.constant 0 : i32
    return %c0_i32, %c0_i32_0, %c0_i32_1 : i32, i32, i32
  }
  func.func @transform_5(%arg0: i32) -> (i32, i32) {
    %c0_i32 = arith.constant 0 : i32
    %c0_i32_0 = arith.constant 0 : i32
    %c0_i32_1 = arith.constant 0 : i32
    return %c0_i32, %c0_i32_0 : i32, i32
  }
  func.func @transform_6(%arg0: i32) -> (i32, i32) {
    %c0_i32 = arith.constant 0 : i32
    %c0_i32_0 = arith.constant 0 : i32
    %c0_i32_1 = arith.constant 0 : i32
    return %c0_i32, %c0_i32_0 : i32, i32
  }
  func.func @transform_7(%arg0: i32) -> (i32, i32) {
    %c0_i32 = arith.constant 0 : i32
    %c0_i32_0 = arith.constant 0 : i32
    return %arg0, %c0_i32 : i32, i32
  }
}

</mosaic_0001>

<llo_original>
// kernel: dense_warp_forward.1
$region0: #{dense_warp_forward.1}
  #allocation0 [shape = 'u32[]', space=smem, size = 0x4, offset = 0x4, fixed_abs, tag = 'smem constant byte address 0x4 - core index']
  #allocation1 [shape = 'u32[144,128]{1,0:T(1,128)}', space=vmem, size = 0x12000, scoped, tag = 'internal scratch']
  %s0 = inlined_call_operand.vmem [shape: bf16[128,128], index: 0, kind: input, shape index: {}]
  %s1 = inlined_call_operand.vmem [shape: f32[128,3], index: 1, kind: input, shape index: {}]
  %s2 = inlined_call_operand.vmem [shape: bf16[2,128,256], index: 2, kind: input, shape index: {}]
  %s3 = inlined_call_operand.hbm [shape: bf16[5,256,256], index: 3, kind: input, shape index: {}]
  %s4 = inlined_call_operand.vmem [shape: f32[6,1,256], index: 4, kind: input, shape index: {}]
  %s5 = inlined_call_operand.vmem [shape: bf16[256,128], index: 5, kind: input, shape index: {}]
  %s6 = inlined_call_operand.vmem [shape: f32[1,128], index: 6, kind: input, shape index: {}]
  %s7 = inlined_call_operand.vmem [shape: f32[128,3], index: 7, kind: output, shape index: {}]
  %s8 = sld [smem:[#allocation0]]
  $region42: #{dense_warp_forward.1} parent=0
    _
  %s10 = ssub.s32 1, %s8
  %s11 = scalar_select 0, %s10, %s8
  $region1: #{dense_warp_forward.1} parent=0
    #allocation2 [shape = 'u8[655360]{0}', space=vmem, size = 0xa0000, scoped, tag = 'input window, operand 3, single buffered']
    #allocation3 [shape = 's32[1]{0}', space=sflag, size = 0x4, scoped, tag = 'scoped memory for dense_warp_forward.1']
    %12 = vsyncpa [#allocation3], 0
    // Predicated region
    $region2: #{dense_warp_forward.1} parent=1 // pred_check
      _
    $region3: #{dense_warp_forward.1} parent=1 // pred_check_branch
      %14 = sbr.rel (0) target = $region5
    $region4: #{dense_warp_forward.1} parent=1 // pred_region
      _
    $region5: #{dense_warp_forward.1} parent=1 // pred_fallthru
      _
    // Predicated region
    $region6: #{dense_warp_forward.1} parent=1 // pred_check
      _
    $region7: #{dense_warp_forward.1} parent=1 // pred_check_branch
      %16 = sbr.rel (0) target = $region9
    $region8: #{dense_warp_forward.1} parent=1 // pred_region
      _
    $region9: #{dense_warp_forward.1} parent=1 // pred_fallthru
      _
    // Predicated region
    $region10: #{dense_warp_forward.1} parent=1 // pred_check
      _
    $region11: #{dense_warp_forward.1} parent=1 // pred_check_branch
      %18 = sbr.rel (0) target = $region13
    $region12: #{dense_warp_forward.1} parent=1 // pred_region
      _
    $region13: #{dense_warp_forward.1} parent=1 // pred_fallthru
      _
    // Predicated region
    $region14: #{dense_warp_forward.1} parent=1 // pred_check
      _
    $region15: #{dense_warp_forward.1} parent=1 // pred_check_branch
      %20 = sbr.rel (0) target = $region17
    $region16: #{dense_warp_forward.1} parent=1 // pred_region
      %s22 = ssub.s32 20480, 20480
      %23 = vsyncadd [#allocation3], %s22
      %s24 = sshll.u32 [#allocation2], 4
      %s25 = int_to_ptr.vmem [resolvable:$true] %s24
      %30 = dma.hbm_to_vmem [thread:$0]  %s3, 20480, %s25, [#allocation3], 128, 128, 8
    $region17: #{dense_warp_forward.1} parent=1 // pred_fallthru
      _
    // Predicated region
    $region18: #{dense_warp_forward.1} parent=1 // pred_check
      _
    $region19: #{dense_warp_forward.1} parent=1 // pred_check_branch
      %32 = sbr.rel (0) target = $region21
    $region20: #{dense_warp_forward.1} parent=1 // pred_region
      _
    $region21: #{dense_warp_forward.1} parent=1 // pred_fallthru
      _
    // Predicated region
    $region22: #{dense_warp_forward.1} parent=1 // pred_check
      _
    $region23: #{dense_warp_forward.1} parent=1 // pred_check_branch
      %34 = sbr.rel (0) target = $region25
    $region24: #{dense_warp_forward.1} parent=1 // pred_region
      _
    $region25: #{dense_warp_forward.1} parent=1 // pred_fallthru
      _
    // Predicated region
    $region26: #{dense_warp_forward.1} parent=1 // pred_check
      _
    $region27: #{dense_warp_forward.1} parent=1 // pred_check_branch
      %36 = sbr.rel (0) target = $region29
    $region28: #{dense_warp_forward.1} parent=1 // pred_region
      _
    $region29: #{dense_warp_forward.1} parent=1 // pred_fallthru
      _
    // Predicated region
    $region30: #{dense_warp_forward.1} parent=1 // pred_check
      _
    $region31: #{dense_warp_forward.1} parent=1 // pred_check_branch
      %38 = sbr.rel (0) target = $region33
    $region32: #{dense_warp_forward.1} parent=1 // pred_region
      %39 = dma.done [#allocation3], 20480
    $region33: #{dense_warp_forward.1} parent=1 // pred_fallthru
      _
    %v41 = vld [vmem:[%s0] sm:$0xf]
    %v42 = vld [vmem:[%s0 + $0x4] sm:$0xf]
    %v43 = vld [vmem:[%s0 + $0x8] sm:$0xf]
    %v44 = vld [vmem:[%s0 + $0xc] sm:$0xf]
    %v45 = vld [vmem:[%s0 + $0x10] sm:$0xf]
    %v46 = vld [vmem:[%s0 + $0x14] sm:$0xf]
    %v47 = vld [vmem:[%s0 + $0x18] sm:$0xf]
    %v48 = vld [vmem:[%s0 + $0x1c] sm:$0xf]
    %v49 = vld [vmem:[%s0 + $0x20] sm:$0xf]
    %v50 = vld [vmem:[%s0 + $0x24] sm:$0xf]
    %v51 = vld [vmem:[%s0 + $0x28] sm:$0xf]
    %v52 = vld [vmem:[%s0 + $0x2c] sm:$0xf]
    %v53 = vld [vmem:[%s0 + $0x30] sm:$0xf]
    %v54 = vld [vmem:[%s0 + $0x34] sm:$0xf]
    %v55 = vld [vmem:[%s0 + $0x38] sm:$0xf]
    %v56 = vld [vmem:[%s0 + $0x3c] sm:$0xf]
    %v57 = vld [vmem:[%s2] sm:$0xff]
    %v58 = vld [vmem:[%s2 + $0x8] sm:$0xff]
    %v59 = vld [vmem:[%s2 + $0x10] sm:$0xff]
    %v60 = vld [vmem:[%s2 + $0x18] sm:$0xff]
    %v61 = vld [vmem:[%s2 + $0x20] sm:$0xff]
    %v62 = vld [vmem:[%s2 + $0x28] sm:$0xff]
    %v63 = vld [vmem:[%s2 + $0x30] sm:$0xff]
    %v64 = vld [vmem:[%s2 + $0x38] sm:$0xff]
    %v65 = vld [vmem:[%s2 + $0x40] sm:$0xff]
    %v66 = vld [vmem:[%s2 + $0x48] sm:$0xff]
    %v67 = vld [vmem:[%s2 + $0x50] sm:$0xff]
    %v68 = vld [vmem:[%s2 + $0x58] sm:$0xff]
    %v69 = vld [vmem:[%s2 + $0x60] sm:$0xff]
    %v70 = vld [vmem:[%s2 + $0x68] sm:$0xff]
    %v71 = vld [vmem:[%s2 + $0x70] sm:$0xff]
    %v72 = vld [vmem:[%s2 + $0x78] sm:$0xff]
    %v73 = vld [vmem:[%s4] sm:$0x3]
    %v75 = vlaneseq
    %v76 = vshrl.u32 %v75, 7
    %v77 = vsub.s32 0, %v76
    %v78 = vrot.slane %v73, %v77
    %v79 = vlaneseq
    %v80 = vshrl.u32 %v79, 7
    %v81 = vsub.s32 1, %v80
    %v82 = vrot.slane %v73, %v81
    %v101 = vunpack.c.l.b16 %v41
    %v102 = vunpack.c.l.b16 %v42
    %v103 = vunpack.c.l.b16 %v43
    %v104 = vunpack.c.l.b16 %v44
    %v105 = vunpack.c.l.b16 %v45
    %v106 = vunpack.c.l.b16 %v46
    %v107 = vunpack.c.l.b16 %v47
    %v108 = vunpack.c.l.b16 %v48
    %v109 = vunpack.c.l.b16 %v49
    %v110 = vunpack.c.l.b16 %v50
    %v111 = vunpack.c.l.b16 %v51
    %v112 = vunpack.c.l.b16 %v52
    %v113 = vunpack.c.l.b16 %v53
    %v114 = vunpack.c.l.b16 %v54
    %v115 = vunpack.c.l.b16 %v55
    %v116 = vunpack.c.l.b16 %v56
    %v117 = vpack.c.b16 %v102, %v101
    %v118 = vpack.c.b16 %v104, %v103
    %v119 = vpack.c.b16 %v106, %v105
    %v120 = vpack.c.b16 %v108, %v107
    %v121 = vpack.c.b16 %v110, %v109
    %v122 = vpack.c.b16 %v112, %v111
    %v123 = vpack.c.b16 %v114, %v113
    %v124 = vpack.c.b16 %v116, %v115
    %v149 = vunpack.c.l.b16 %v57
    %v150 = vunpack.c.h.b16 %v57
    %v151 = vunpack.c.l.b16 %v58
    %v152 = vunpack.c.h.b16 %v58
    %v153 = vunpack.c.l.b16 %v59
    %v154 = vunpack.c.h.b16 %v59
    %v155 = vunpack.c.l.b16 %v60
    %v156 = vunpack.c.h.b16 %v60
    %v157 = vunpack.c.l.b16 %v61
    %v158 = vunpack.c.h.b16 %v61
    %v159 = vunpack.c.l.b16 %v62
    %v160 = vunpack.c.h.b16 %v62
    %v161 = vunpack.c.l.b16 %v63
    %v162 = vunpack.c.h.b16 %v63
    %v163 = vunpack.c.l.b16 %v64
    %v164 = vunpack.c.h.b16 %v64
    %v165 = vunpack.c.l.b16 %v65
    %v166 = vunpack.c.h.b16 %v65
    %v167 = vunpack.c.l.b16 %v66
    %v168 = vunpack.c.h.b16 %v66
    %v169 = vunpack.c.l.b16 %v67
    %v170 = vunpack.c.h.b16 %v67
    %v171 = vunpack.c.l.b16 %v68
    %v172 = vunpack.c.h.b16 %v68
    %v173 = vunpack.c.l.b16 %v69
    %v174 = vunpack.c.h.b16 %v69
    %v175 = vunpack.c.l.b16 %v70
    %v176 = vunpack.c.h.b16 %v70
    %v177 = vunpack.c.l.b16 %v71
    %v178 = vunpack.c.h.b16 %v71
    %v179 = vunpack.c.l.b16 %v72
    %v180 = vunpack.c.h.b16 %v72
    %v181 = vpack.c.b16 %v151, %v149
    %v182 = vpack.c.b16 %v152, %v150
    %v183 = vpack.c.b16 %v155, %v153
    %v184 = vpack.c.b16 %v156, %v154
    %v185 = vpack.c.b16 %v159, %v157
    %v186 = vpack.c.b16 %v160, %v158
    %v187 = vpack.c.b16 %v163, %v161
    %v188 = vpack.c.b16 %v164, %v162
    %v189 = vpack.c.b16 %v167, %v165
    %v190 = vpack.c.b16 %v168, %v166
    %v191 = vpack.c.b16 %v171, %v169
    %v192 = vpack.c.b16 %v172, %v170
    %v193 = vpack.c.b16 %v175, %v173
    %v194 = vpack.c.b16 %v176, %v174
    %v195 = vpack.c.b16 %v179, %v177
    %v196 = vpack.c.b16 %v180, %v178
    %213 = vmatprep.subr.bf16.mxu0 %v196
    %214 = vmatpush1.bf16.msra.mxu0 %v195
    %215 = vmatprep.subr.bf16.mxu0 %v194
    %216 = vmatpush1.bf16.msra.mxu0 %v193
    %217 = vmatprep.subr.bf16.mxu0 %v192
    %218 = vmatpush1.bf16.msra.mxu0 %v191
    %219 = vmatprep.subr.bf16.mxu0 %v190
    %220 = vmatpush1.bf16.msra.mxu0 %v189
    %221 = vmatprep.subr.bf16.mxu0 %v188
    %222 = vmatpush1.bf16.msra.mxu0 %v187
    %223 = vmatprep.subr.bf16.mxu0 %v186
    %224 = vmatpush1.bf16.msra.mxu0 %v185
    %225 = vmatprep.subr.bf16.mxu0 %v184
    %226 = vmatpush1.bf16.msra.mxu0 %v183
    %227 = vmatprep.subr.bf16.mxu0 %v182
    %228 = vmatpush1.bf16.msra.mxu0 %v181
    %229 = vmatprep.subr.bf16.mxu0 0
    %230 = vmatpush2.bf16.msra.mxu0 0
    %231 = vmatprep.subr.bf16.mxu0 0
    %232 = vmatpush2.bf16.msra.mxu0 0
    %233 = vmatprep.subr.bf16.mxu0 0
    %234 = vmatpush2.bf16.msra.mxu0 0
    %235 = vmatprep.subr.bf16.mxu0 0
    %236 = vmatpush2.bf16.msra.mxu0 0
    %237 = vmatprep.subr.bf16.mxu0 0
    %238 = vmatpush2.bf16.msra.mxu0 0
    %239 = vmatprep.subr.bf16.mxu0 0
    %240 = vmatpush2.bf16.msra.mxu0 0
    %241 = vmatprep.subr.bf16.mxu0 0
    %242 = vmatpush2.bf16.msra.mxu0 0
    %243 = vmatprep.subr.bf16.mxu0 0
    %244 = vmatpush2.bf16.msra.mxu0 0
    %245 = vmatprep.mubr.bf16.mxu0 0
    %246 = vmatmul.mubr.bf16.gmra.mxu0 %v117
    %v247 = vpop.f32.mrf.mxu0
    %v248 = vadd.f32 %v78, %v247
    %v249 = vpop.f32.mrf.mxu0
    %v250 = vadd.f32 %v82, %v249
    %v251 = vpop.f32.mrf.mxu0
    %v252 = vadd.f32 %v78, %v251
    %v253 = vpop.f32.mrf.mxu0
    %v254 = vadd.f32 %v82, %v253
    %255 = vmatprep.mubr.bf16.mxu0 0
    %256 = vmatmul.mubr.bf16.gmra.mxu0 %v118
    %v257 = vpop.f32.mrf.mxu0
    %v258 = vadd.f32 %v78, %v257
    %v259 = vpop.f32.mrf.mxu0
    %v260 = vadd.f32 %v82, %v259
    %v261 = vpop.f32.mrf.mxu0
    %v262 = vadd.f32 %v78, %v261
    %v263 = vpop.f32.mrf.mxu0
    %v264 = vadd.f32 %v82, %v263
    %265 = vmatprep.mubr.bf16.mxu0 0
    %266 = vmatmul.mubr.bf16.gmra.mxu0 %v119
    %v267 = vpop.f32.mrf.mxu0
    %v268 = vadd.f32 %v78, %v267
    %v269 = vpop.f32.mrf.mxu0
    %v270 = vadd.f32 %v82, %v269
    %v271 = vpop.f32.mrf.mxu0
    %v272 = vadd.f32 %v78, %v271
    %v273 = vpop.f32.mrf.mxu0
    %v274 = vadd.f32 %v82, %v273
    %275 = vmatprep.mubr.bf16.mxu0 0
    %276 = vmatmul.mubr.bf16.gmra.mxu0 %v120
    %v277 = vpop.f32.mrf.mxu0
    %v278 = vadd.f32 %v78, %v277
    %v279 = vpop.f32.mrf.mxu0
    %v280 = vadd.f32 %v82, %v279
    %v281 = vpop.f32.mrf.mxu0
    %v282 = vadd.f32 %v78, %v281
    %v283 = vpop.f32.mrf.mxu0
    %v284 = vadd.f32 %v82, %v283
    %285 = vmatprep.mubr.bf16.mxu0 0
    %286 = vmatmul.mubr.bf16.gmra.mxu0 %v121
    %v287 = vpop.f32.mrf.mxu0
    %v288 = vadd.f32 %v78, %v287
    %v289 = vpop.f32.mrf.mxu0
    %v290 = vadd.f32 %v82, %v289
    %v291 = vpop.f32.mrf.mxu0
    %v292 = vadd.f32 %v78, %v291
    %v293 = vpop.f32.mrf.mxu0
    %v294 = vadd.f32 %v82, %v293
    %295 = vmatprep.mubr.bf16.mxu0 0
    %296 = vmatmul.mubr.bf16.gmra.mxu0 %v122
    %v297 = vpop.f32.mrf.mxu0
    %v298 = vadd.f32 %v78, %v297
    %v299 = vpop.f32.mrf.mxu0
    %v300 = vadd.f32 %v82, %v299
    %v301 = vpop.f32.mrf.mxu0
    %v302 = vadd.f32 %v78, %v301
    %v303 = vpop.f32.mrf.mxu0
    %v304 = vadd.f32 %v82, %v303
    %305 = vmatprep.mubr.bf16.mxu0 0
    %306 = vmatmul.mubr.bf16.gmra.mxu0 %v123
    %v307 = vpop.f32.mrf.mxu0
    %v308 = vadd.f32 %v78, %v307
    %v309 = vpop.f32.mrf.mxu0
    %v310 = vadd.f32 %v82, %v309
    %v311 = vpop.f32.mrf.mxu0
    %v312 = vadd.f32 %v78, %v311
    %v313 = vpop.f32.mrf.mxu0
    %v314 = vadd.f32 %v82, %v313
    %315 = vmatprep.mubr.bf16.mxu0 0
    %316 = vmatmul.mubr.bf16.gmra.mxu0 %v124
    %v317 = vpop.f32.mrf.mxu0
    %v318 = vadd.f32 %v78, %v317
    %v319 = vpop.f32.mrf.mxu0
    %v320 = vadd.f32 %v82, %v319
    %v321 = vpop.f32.mrf.mxu0
    %v322 = vadd.f32 %v78, %v321
    %v323 = vpop.f32.mrf.mxu0
    %v324 = vadd.f32 %v82, %v323
    %325 = vdwg.mxu0
    %v326 = vmax.f32 %v248, 0.0
    %v327 = vmax.f32 %v250, 0.0
    %v328 = vmax.f32 %v252, 0.0
    %v329 = vmax.f32 %v254, 0.0
    %v330 = vmax.f32 %v258, 0.0
    %v331 = vmax.f32 %v260, 0.0
    %v332 = vmax.f32 %v262, 0.0
    %v333 = vmax.f32 %v264, 0.0
    %v334 = vmax.f32 %v268, 0.0
    %v335 = vmax.f32 %v270, 0.0
    %v336 = vmax.f32 %v272, 0.0
    %v337 = vmax.f32 %v274, 0.0
    %v338 = vmax.f32 %v278, 0.0
    %v339 = vmax.f32 %v280, 0.0
    %v340 = vmax.f32 %v282, 0.0
    %v341 = vmax.f32 %v284, 0.0
    %v342 = vmax.f32 %v288, 0.0
    %v343 = vmax.f32 %v290, 0.0
    %v344 = vmax.f32 %v292, 0.0
    %v345 = vmax.f32 %v294, 0.0
    %v346 = vmax.f32 %v298, 0.0
    %v347 = vmax.f32 %v300, 0.0
    %v348 = vmax.f32 %v302, 0.0
    %v349 = vmax.f32 %v304, 0.0
    %v350 = vmax.f32 %v308, 0.0
    %v351 = vmax.f32 %v310, 0.0
    %v352 = vmax.f32 %v312, 0.0
    %v353 = vmax.f32 %v314, 0.0
    %v354 = vmax.f32 %v318, 0.0
    %v355 = vmax.f32 %v320, 0.0
    %v356 = vmax.f32 %v322, 0.0
    %v357 = vmax.f32 %v324, 0.0
    %v358 = vpack.c.bf16 %v328, %v326
    %v359 = vpack.c.bf16 %v329, %v327
    %v360 = vpack.c.bf16 %v332, %v330
    %v361 = vpack.c.bf16 %v333, %v331
    %v362 = vpack.c.bf16 %v336, %v334
    %v363 = vpack.c.bf16 %v337, %v335
    %v364 = vpack.c.bf16 %v340, %v338
    %v365 = vpack.c.bf16 %v341, %v339
    %v366 = vpack.c.bf16 %v344, %v342
    %v367 = vpack.c.bf16 %v345, %v343
    %v368 = vpack.c.bf16 %v348, %v346
    %v369 = vpack.c.bf16 %v349, %v347
    %v370 = vpack.c.bf16 %v352, %v350
    %v371 = vpack.c.bf16 %v353, %v351
    %v372 = vpack.c.bf16 %v356, %v354
    %v373 = vpack.c.bf16 %v357, %v355
    %v374 = vld [vmem:[#allocation2] sm:$0xff]
    %v375 = vld [vmem:[#allocation2 + $0x8] sm:$0xff]
    %v376 = vld [vmem:[#allocation2 + $0x10] sm:$0xff]
    %v377 = vld [vmem:[#allocation2 + $0x18] sm:$0xff]
    %v378 = vld [vmem:[#allocation2 + $0x20] sm:$0xff]
    %v379 = vld [vmem:[#allocation2 + $0x28] sm:$0xff]
    %v380 = vld [vmem:[#allocation2 + $0x30] sm:$0xff]
    %v381 = vld [vmem:[#allocation2 + $0x38] sm:$0xff]
    %v382 = vld [vmem:[#allocation2 + $0x40] sm:$0xff]
    %v383 = vld [vmem:[#allocation2 + $0x48] sm:$0xff]
    %v384 = vld [vmem:[#allocation2 + $0x50] sm:$0xff]
    %v385 = vld [vmem:[#allocation2 + $0x58] sm:$0xff]
    %v386 = vld [vmem:[#allocation2 + $0x60] sm:$0xff]
    %v387 = vld [vmem:[#allocation2 + $0x68] sm:$0xff]
    %v388 = vld [vmem:[#allocation2 + $0x70] sm:$0xff]
    %v389 = vld [vmem:[#allocation2 + $0x78] sm:$0xff]
    %v390 = vld [vmem:[#allocation2 + $0x80] sm:$0xff]
    %v391 = vld [vmem:[#allocation2 + $0x88] sm:$0xff]
    %v392 = vld [vmem:[#allocation2 + $0x90] sm:$0xff]
    %v393 = vld [vmem:[#allocation2 + $0x98] sm:$0xff]
    %v394 = vld [vmem:[#allocation2 + $0xa0] sm:$0xff]
    %v395 = vld [vmem:[#allocation2 + $0xa8] sm:$0xff]
    %v396 = vld [vmem:[#allocation2 + $0xb0] sm:$0xff]
    %v397 = vld [vmem:[#allocation2 + $0xb8] sm:$0xff]
    %v398 = vld [vmem:[#allocation2 + $0xc0] sm:$0xff]
    %v399 = vld [vmem:[#allocation2 + $0xc8] sm:$0xff]
    %v400 = vld [vmem:[#allocation2 + $0xd0] sm:$0xff]
    %v401 = vld [vmem:[#allocation2 + $0xd8] sm:$0xff]
    %v402 = vld [vmem:[#allocation2 + $0xe0] sm:$0xff]
    %v403 = vld [vmem:[#allocation2 + $0xe8] sm:$0xff]
    %v404 = vld [vmem:[#allocation2 + $0xf0] sm:$0xff]
    %v405 = vld [vmem:[#allocation2 + $0xf8] sm:$0xff]
    %s406 = scalar_lea.vmem %s4, 2
    %v407 = vld [vmem:[%s406] sm:$0x3]
    %v409 = vlaneseq
    %v410 = vshrl.u32 %v409, 7
    %v411 = vsub.s32 0, %v410
    %v412 = vrot.slane %v407, %v411
    %v413 = vlaneseq
    %v414 = vshrl.u32 %v413, 7
    %v415 = vsub.s32 1, %v414
    %v416 = vrot.slane %v407, %v415
    %v451 = vunpack.c.l.b16 %v374
    %v452 = vunpack.c.h.b16 %v374
    %v453 = vunpack.c.l.b16 %v375
    %v454 = vunpack.c.h.b16 %v375
    %v455 = vunpack.c.l.b16 %v376
    %v456 = vunpack.c.h.b16 %v376
    %v457 = vunpack.c.l.b16 %v377
    %v458 = vunpack.c.h.b16 %v377
    %v459 = vunpack.c.l.b16 %v378
    %v460 = vunpack.c.h.b16 %v378
    %v461 = vunpack.c.l.b16 %v379
    %v462 = vunpack.c.h.b16 %v379
    %v463 = vunpack.c.l.b16 %v380
    %v464 = vunpack.c.h.b16 %v380
    %v465 = vunpack.c.l.b16 %v381
    %v466 = vunpack.c.h.b16 %v381
    %v467 = vunpack.c.l.b16 %v382
    %v468 = vunpack.c.h.b16 %v382
    %v469 = vunpack.c.l.b16 %v383
    %v470 = vunpack.c.h.b16 %v383
    %v471 = vunpack.c.l.b16 %v384
    %v472 = vunpack.c.h.b16 %v384
    %v473 = vunpack.c.l.b16 %v385
    %v474 = vunpack.c.h.b16 %v385
    %v475 = vunpack.c.l.b16 %v386
    %v476 = vunpack.c.h.b16 %v386
    %v477 = vunpack.c.l.b16 %v387
    %v478 = vunpack.c.h.b16 %v387
    %v479 = vunpack.c.l.b16 %v388
    %v480 = vunpack.c.h.b16 %v388
    %v481 = vunpack.c.l.b16 %v389
    %v482 = vunpack.c.h.b16 %v389
    %v483 = vunpack.c.l.b16 %v390
    %v484 = vunpack.c.h.b16 %v390
    %v485 = vunpack.c.l.b16 %v391
    %v486 = vunpack.c.h.b16 %v391
    %v487 = vunpack.c.l.b16 %v392
    %v488 = vunpack.c.h.b16 %v392
    %v489 = vunpack.c.l.b16 %v393
    %v490 = vunpack.c.h.b16 %v393
    %v491 = vunpack.c.l.b16 %v394
    %v492 = vunpack.c.h.b16 %v394
    %v493 = vunpack.c.l.b16 %v395
    %v494 = vunpack.c.h.b16 %v395
    %v495 = vunpack.c.l.b16 %v396
    %v496 = vunpack.c.h.b16 %v396
    %v497 = vunpack.c.l.b16 %v397
    %v498 = vunpack.c.h.b16 %v397
    %v499 = vunpack.c.l.b16 %v398
    %v500 = vunpack.c.h.b16 %v398
    %v501 = vunpack.c.l.b16 %v399
    %v502 = vunpack.c.h.b16 %v399
    %v503 = vunpack.c.l.b16 %v400
    %v504 = vunpack.c.h.b16 %v400
    %v505 = vunpack.c.l.b16 %v401
    %v506 = vunpack.c.h.b16 %v401
    %v507 = vunpack.c.l.b16 %v402
    %v508 = vunpack.c.h.b16 %v402
    %v509 = vunpack.c.l.b16 %v403
    %v510 = vunpack.c.h.b16 %v403
    %v511 = vunpack.c.l.b16 %v404
    %v512 = vunpack.c.h.b16 %v404
    %v513 = vunpack.c.l.b16 %v405
    %v514 = vunpack.c.h.b16 %v405
    %v515 = vpack.c.b16 %v453, %v451
    %v516 = vpack.c.b16 %v454, %v452
    %v517 = vpack.c.b16 %v457, %v455
    %v518 = vpack.c.b16 %v458, %v456
    %v519 = vpack.c.b16 %v461, %v459
    %v520 = vpack.c.b16 %v462, %v460
    %v521 = vpack.c.b16 %v465, %v463
    %v522 = vpack.c.b16 %v466, %v464
    %v523 = vpack.c.b16 %v469, %v467
    %v524 = vpack.c.b16 %v470, %v468
    %v525 = vpack.c.b16 %v473, %v471
    %v526 = vpack.c.b16 %v474, %v472
    %v527 = vpack.c.b16 %v477, %v475
    %v528 = vpack.c.b16 %v478, %v476
    %v529 = vpack.c.b16 %v481, %v479
    %v530 = vpack.c.b16 %v482, %v480
    %v531 = vpack.c.b16 %v485, %v483
    %v532 = vpack.c.b16 %v486, %v484
    %v533 = vpack.c.b16 %v489, %v487
    %v534 = vpack.c.b16 %v490, %v488
    %v535 = vpack.c.b16 %v493, %v491
    %v536 = vpack.c.b16 %v494, %v492
    %v537 = vpack.c.b16 %v497, %v495
    %v538 = vpack.c.b16 %v498, %v496
    %v539 = vpack.c.b16 %v501, %v499
    %v540 = vpack.c.b16 %v502, %v500
    %v541 = vpack.c.b16 %v505, %v503
    %v542 = vpack.c.b16 %v506, %v504
    %v543 = vpack.c.b16 %v509, %v507
    %v544 = vpack.c.b16 %v510, %v508
    %v545 = vpack.c.b16 %v513, %v511
    %v546 = vpack.c.b16 %v514, %v512
    %579 = vmatprep.subr.bf16.mxu0 %v530
    %580 = vmatpush1.bf16.msra.mxu0 %v529
    %581 = vmatprep.subr.bf16.mxu0 %v528
    %582 = vmatpush1.bf16.msra.mxu0 %v527
    %583 = vmatprep.subr.bf16.mxu0 %v526
    %584 = vmatpush1.bf16.msra.mxu0 %v525
    %585 = vmatprep.subr.bf16.mxu0 %v524
    %586 = vmatpush1.bf16.msra.mxu0 %v523
    %587 = vmatprep.subr.bf16.mxu0 %v522
    %588 = vmatpush1.bf16.msra.mxu0 %v521
    %589 = vmatprep.subr.bf16.mxu0 %v520
    %590 = vmatpush1.bf16.msra.mxu0 %v519
    %591 = vmatprep.subr.bf16.mxu0 %v518
    %592 = vmatpush1.bf16.msra.mxu0 %v517
    %593 = vmatprep.subr.bf16.mxu0 %v516
    %594 = vmatpush1.bf16.msra.mxu0 %v515
    %595 = vmatprep.subr.bf16.mxu0 %v546
    %596 = vmatpush2.bf16.msra.mxu0 %v545
    %597 = vmatprep.subr.bf16.mxu0 %v544
    %598 = vmatpush2.bf16.msra.mxu0 %v543
    %599 = vmatprep.subr.bf16.mxu0 %v542
    %600 = vmatpush2.bf16.msra.mxu0 %v541
    %601 = vmatprep.subr.bf16.mxu0 %v540
    %602 = vmatpush2.bf16.msra.mxu0 %v539
    %603 = vmatprep.subr.bf16.mxu0 %v538
    %604 = vmatpush2.bf16.msra.mxu0 %v537
    %605 = vmatprep.subr.bf16.mxu0 %v536
    %606 = vmatpush2.bf16.msra.mxu0 %v535
    %607 = vmatprep.subr.bf16.mxu0 %v534
    %608 = vmatpush2.bf16.msra.mxu0 %v533
    %609 = vmatprep.subr.bf16.mxu0 %v532
    %610 = vmatpush2.bf16.msra.mxu0 %v531
    %611 = vmatprep.mubr.bf16.mxu0 %v359
    %612 = vmatmul.mubr.bf16.gmra.mxu0 %v358
    %v613 = vpop.f32.mrf.mxu0
    %v614 = vadd.f32 %v412, %v613
    %v615 = vpop.f32.mrf.mxu0
    %v616 = vadd.f32 %v416, %v615
    %v617 = vpop.f32.mrf.mxu0
    %v618 = vadd.f32 %v412, %v617
    %v619 = vpop.f32.mrf.mxu0
    %v620 = vadd.f32 %v416, %v619
    %621 = vmatprep.mubr.bf16.mxu0 %v361
    %622 = vmatmul.mubr.bf16.gmra.mxu0 %v360
    %v623 = vpop.f32.mrf.mxu0
    %v624 = vadd.f32 %v412, %v623
    %v625 = vpop.f32.mrf.mxu0
    %v626 = vadd.f32 %v416, %v625
    %v627 = vpop.f32.mrf.mxu0
    %v628 = vadd.f32 %v412, %v627
    %v629 = vpop.f32.mrf.mxu0
    %v630 = vadd.f32 %v416, %v629
    %631 = vmatprep.mubr.bf16.mxu0 %v363
    %632 = vmatmul.mubr.bf16.gmra.mxu0 %v362
    %v633 = vpop.f32.mrf.mxu0
    %v634 = vadd.f32 %v412, %v633
    %v635 = vpop.f32.mrf.mxu0
    %v636 = vadd.f32 %v416, %v635
    %v637 = vpop.f32.mrf.mxu0
    %v638 = vadd.f32 %v412, %v637
    %v639 = vpop.f32.mrf.mxu0
    %v640 = vadd.f32 %v416, %v639
    %641 = vmatprep.mubr.bf16.mxu0 %v365
    %642 = vmatmul.mubr.bf16.gmra.mxu0 %v364
    %v643 = vpop.f32.mrf.mxu0
    %v644 = vadd.f32 %v412, %v643
    %v645 = vpop.f32.mrf.mxu0
    %v646 = vadd.f32 %v416, %v645
    %v647 = vpop.f32.mrf.mxu0
    %v648 = vadd.f32 %v412, %v647
    %v649 = vpop.f32.mrf.mxu0
    %v650 = vadd.f32 %v416, %v649
    %651 = vmatprep.mubr.bf16.mxu0 %v367
    %652 = vmatmul.mubr.bf16.gmra.mxu0 %v366
    %v653 = vpop.f32.mrf.mxu0
    %v654 = vadd.f32 %v412, %v653
    %v655 = vpop.f32.mrf.mxu0
    %v656 = vadd.f32 %v416, %v655
    %v657 = vpop.f32.mrf.mxu0
    %v658 = vadd.f32 %v412, %v657
    %v659 = vpop.f32.mrf.mxu0
    %v660 = vadd.f32 %v416, %v659
    %661 = vmatprep.mubr.bf16.mxu0 %v369
    %662 = vmatmul.mubr.bf16.gmra.mxu0 %v368
    %v663 = vpop.f32.mrf.mxu0
    %v664 = vadd.f32 %v412, %v663
    %v665 = vpop.f32.mrf.mxu0
    %v666 = vadd.f32 %v416, %v665
    %v667 = vpop.f32.mrf.mxu0
    %v668 = vadd.f32 %v412, %v667
    %v669 = vpop.f32.mrf.mxu0
    %v670 = vadd.f32 %v416, %v669
    %671 = vmatprep.mubr.bf16.mxu0 %v371
    %672 = vmatmul.mubr.bf16.gmra.mxu0 %v370
    %v673 = vpop.f32.mrf.mxu0
    %v674 = vadd.f32 %v412, %v673
    %v675 = vpop.f32.mrf.mxu0
    %v676 = vadd.f32 %v416, %v675
    %v677 = vpop.f32.mrf.mxu0
    %v678 = vadd.f32 %v412, %v677
    %v679 = vpop.f32.mrf.mxu0
    %v680 = vadd.f32 %v416, %v679
    %681 = vmatprep.mubr.bf16.mxu0 %v373
    %682 = vmatmul.mubr.bf16.gmra.mxu0 %v372
    %v683 = vpop.f32.mrf.mxu0
    %v684 = vadd.f32 %v412, %v683
    %v685 = vpop.f32.mrf.mxu0
    %v686 = vadd.f32 %v416, %v685
    %v687 = vpop.f32.mrf.mxu0
    %v688 = vadd.f32 %v412, %v687
    %v689 = vpop.f32.mrf.mxu0
    %v690 = vadd.f32 %v416, %v689
    %691 = vdwg.mxu0
    %v692 = vmax.f32 %v614, 0.0
    %v693 = vmax.f32 %v616, 0.0
    %v694 = vmax.f32 %v618, 0.0
    %v695 = vmax.f32 %v620, 0.0
    %v696 = vmax.f32 %v624, 0.0
    %v697 = vmax.f32 %v626, 0.0
    %v698 = vmax.f32 %v628, 0.0
    %v699 = vmax.f32 %v630, 0.0
    %v700 = vmax.f32 %v634, 0.0
    %v701 = vmax.f32 %v636, 0.0
    %v702 = vmax.f32 %v638, 0.0
    %v703 = vmax.f32 %v640, 0.0
    %v704 = vmax.f32 %v644, 0.0
    %v705 = vmax.f32 %v646, 0.0
    %v706 = vmax.f32 %v648, 0.0
    %v707 = vmax.f32 %v650, 0.0
    %v708 = vmax.f32 %v654, 0.0
    %v709 = vmax.f32 %v656, 0.0
    %v710 = vmax.f32 %v658, 0.0
    %v711 = vmax.f32 %v660, 0.0
    %v712 = vmax.f32 %v664, 0.0
    %v713 = vmax.f32 %v666, 0.0
    %v714 = vmax.f32 %v668, 0.0
    %v715 = vmax.f32 %v670, 0.0
    %v716 = vmax.f32 %v674, 0.0
    %v717 = vmax.f32 %v676, 0.0
    %v718 = vmax.f32 %v678, 0.0
    %v719 = vmax.f32 %v680, 0.0
    %v720 = vmax.f32 %v684, 0.0
    %v721 = vmax.f32 %v686, 0.0
    %v722 = vmax.f32 %v688, 0.0
    %v723 = vmax.f32 %v690, 0.0
    %v724 = vpack.c.bf16 %v694, %v692
    %v725 = vpack.c.bf16 %v695, %v693
    %v726 = vpack.c.bf16 %v698, %v696
    %v727 = vpack.c.bf16 %v699, %v697
    %v728 = vpack.c.bf16 %v702, %v700
    %v729 = vpack.c.bf16 %v703, %v701
    %v730 = vpack.c.bf16 %v706, %v704
    %v731 = vpack.c.bf16 %v707, %v705
    %v732 = vpack.c.bf16 %v710, %v708
    %v733 = vpack.c.bf16 %v711, %v709
    %v734 = vpack.c.bf16 %v714, %v712
    %v735 = vpack.c.bf16 %v715, %v713
    %v736 = vpack.c.bf16 %v718, %v716
    %v737 = vpack.c.bf16 %v719, %v717
    %v738 = vpack.c.bf16 %v722, %v720
    %v739 = vpack.c.bf16 %v723, %v721
    %s740 = scalar_lea.vmem [#allocation2], 256
    %v741 = vld [vmem:[%s740] sm:$0xff]
    %v742 = vld [vmem:[%s740 + $0x8] sm:$0xff]
    %v743 = vld [vmem:[%s740 + $0x10] sm:$0xff]
    %v744 = vld [vmem:[%s740 + $0x18] sm:$0xff]
    %v745 = vld [vmem:[%s740 + $0x20] sm:$0xff]
    %v746 = vld [vmem:[%s740 + $0x28] sm:$0xff]
    %v747 = vld [vmem:[%s740 + $0x30] sm:$0xff]
    %v748 = vld [vmem:[%s740 + $0x38] sm:$0xff]
    %v749 = vld [vmem:[%s740 + $0x40] sm:$0xff]
    %v750 = vld [vmem:[%s740 + $0x48] sm:$0xff]
    %v751 = vld [vmem:[%s740 + $0x50] sm:$0xff]
    %v752 = vld [vmem:[%s740 + $0x58] sm:$0xff]
    %v753 = vld [vmem:[%s740 + $0x60] sm:$0xff]
    %v754 = vld [vmem:[%s740 + $0x68] sm:$0xff]
    %v755 = vld [vmem:[%s740 + $0x70] sm:$0xff]
    %v756 = vld [vmem:[%s740 + $0x78] sm:$0xff]
    %v757 = vld [vmem:[%s740 + $0x80] sm:$0xff]
    %v758 = vld [vmem:[%s740 + $0x88] sm:$0xff]
    %v759 = vld [vmem:[%s740 + $0x90] sm:$0xff]
    %v760 = vld [vmem:[%s740 + $0x98] sm:$0xff]
    %v761 = vld [vmem:[%s740 + $0xa0] sm:$0xff]
    %v762 = vld [vmem:[%s740 + $0xa8] sm:$0xff]
    %v763 = vld [vmem:[%s740 + $0xb0] sm:$0xff]
    %v764 = vld [vmem:[%s740 + $0xb8] sm:$0xff]
    %v765 = vld [vmem:[%s740 + $0xc0] sm:$0xff]
    %v766 = vld [vmem:[%s740 + $0xc8] sm:$0xff]
    %v767 = vld [vmem:[%s740 + $0xd0] sm:$0xff]
    %v768 = vld [vmem:[%s740 + $0xd8] sm:$0xff]
    %v769 = vld [vmem:[%s740 + $0xe0] sm:$0xff]
    %v770 = vld [vmem:[%s740 + $0xe8] sm:$0xff]
    %v771 = vld [vmem:[%s740 + $0xf0] sm:$0xff]
    %v772 = vld [vmem:[%s740 + $0xf8] sm:$0xff]
    %s773 = scalar_lea.vmem %s4, 4
    %v774 = vld [vmem:[%s773] sm:$0x3]
    %v776 = vlaneseq
    %v777 = vshrl.u32 %v776, 7
    %v778 = vsub.s32 0, %v777
    %v779 = vrot.slane %v774, %v778
    %v780 = vlaneseq
    %v781 = vshrl.u32 %v780, 7
    %v782 = vsub.s32 1, %v781
    %v783 = vrot.slane %v774, %v782
    %v818 = vunpack.c.l.b16 %v741
    %v819 = vunpack.c.h.b16 %v741
    %v820 = vunpack.c.l.b16 %v742
    %v821 = vunpack.c.h.b16 %v742
    %v822 = vunpack.c.l.b16 %v743
    %v823 = vunpack.c.h.b16 %v743
    %v824 = vunpack.c.l.b16 %v744
    %v825 = vunpack.c.h.b16 %v744
    %v826 = vunpack.c.l.b16 %v745
    %v827 = vunpack.c.h.b16 %v745
    %v828 = vunpack.c.l.b16 %v746
    %v829 = vunpack.c.h.b16 %v746
    %v830 = vunpack.c.l.b16 %v747
    %v831 = vunpack.c.h.b16 %v747
    %v832 = vunpack.c.l.b16 %v748
    %v833 = vunpack.c.h.b16 %v748
    %v834 = vunpack.c.l.b16 %v749
    %v835 = vunpack.c.h.b16 %v749
    %v836 = vunpack.c.l.b16 %v750
    %v837 = vunpack.c.h.b16 %v750
    %v838 = vunpack.c.l.b16 %v751
    %v839 = vunpack.c.h.b16 %v751
    %v840 = vunpack.c.l.b16 %v752
    %v841 = vunpack.c.h.b16 %v752
    %v842 = vunpack.c.l.b16 %v753
    %v843 = vunpack.c.h.b16 %v753
    %v844 = vunpack.c.l.b16 %v754
    %v845 = vunpack.c.h.b16 %v754
    %v846 = vunpack.c.l.b16 %v755
    %v847 = vunpack.c.h.b16 %v755
    %v848 = vunpack.c.l.b16 %v756
    %v849 = vunpack.c.h.b16 %v756
    %v850 = vunpack.c.l.b16 %v757
    %v851 = vunpack.c.h.b16 %v757
    %v852 = vunpack.c.l.b16 %v758
    %v853 = vunpack.c.h.b16 %v758
    %v854 = vunpack.c.l.b16 %v759
    %v855 = vunpack.c.h.b16 %v759
    %v856 = vunpack.c.l.b16 %v760
    %v857 = vunpack.c.h.b16 %v760
    %v858 = vunpack.c.l.b16 %v761
    %v859 = vunpack.c.h.b16 %v761
    %v860 = vunpack.c.l.b16 %v762
    %v861 = vunpack.c.h.b16 %v762
    %v862 = vunpack.c.l.b16 %v763
    %v863 = vunpack.c.h.b16 %v763
    %v864 = vunpack.c.l.b16 %v764
    %v865 = vunpack.c.h.b16 %v764
    %v866 = vunpack.c.l.b16 %v765
    %v867 = vunpack.c.h.b16 %v765
    %v868 = vunpack.c.l.b16 %v766
    %v869 = vunpack.c.h.b16 %v766
    %v870 = vunpack.c.l.b16 %v767
    %v871 = vunpack.c.h.b16 %v767
    %v872 = vunpack.c.l.b16 %v768
    %v873 = vunpack.c.h.b16 %v768
    %v874 = vunpack.c.l.b16 %v769
    %v875 = vunpack.c.h.b16 %v769
    %v876 = vunpack.c.l.b16 %v770
    %v877 = vunpack.c.h.b16 %v770
    %v878 = vunpack.c.l.b16 %v771
    %v879 = vunpack.c.h.b16 %v771
    %v880 = vunpack.c.l.b16 %v772
    %v881 = vunpack.c.h.b16 %v772
    %v882 = vpack.c.b16 %v820, %v818
    %v883 = vpack.c.b16 %v821, %v819
    %v884 = vpack.c.b16 %v824, %v822
    %v885 = vpack.c.b16 %v825, %v823
    %v886 = vpack.c.b16 %v828, %v826
    %v887 = vpack.c.b16 %v829, %v827
    %v888 = vpack.c.b16 %v832, %v830
    %v889 = vpack.c.b16 %v833, %v831
    %v890 = vpack.c.b16 %v836, %v834
    %v891 = vpack.c.b16 %v837, %v835
    %v892 = vpack.c.b16 %v840, %v838
    %v893 = vpack.c.b16 %v841, %v839
    %v894 = vpack.c.b16 %v844, %v842
    %v895 = vpack.c.b16 %v845, %v843
    %v896 = vpack.c.b16 %v848, %v846
    %v897 = vpack.c.b16 %v849, %v847
    %v898 = vpack.c.b16 %v852, %v850
    %v899 = vpack.c.b16 %v853, %v851
    %v900 = vpack.c.b16 %v856, %v854
    %v901 = vpack.c.b16 %v857, %v855
    %v902 = vpack.c.b16 %v860, %v858
    %v903 = vpack.c.b16 %v861, %v859
    %v904 = vpack.c.b16 %v864, %v862
    %v905 = vpack.c.b16 %v865, %v863
    %v906 = vpack.c.b16 %v868, %v866
    %v907 = vpack.c.b16 %v869, %v867
    %v908 = vpack.c.b16 %v872, %v870
    %v909 = vpack.c.b16 %v873, %v871
    %v910 = vpack.c.b16 %v876, %v874
    %v911 = vpack.c.b16 %v877, %v875
    %v912 = vpack.c.b16 %v880, %v878
    %v913 = vpack.c.b16 %v881, %v879
    %946 = vmatprep.subr.bf16.mxu0 %v897
    %947 = vmatpush1.bf16.msra.mxu0 %v896
    %948 = vmatprep.subr.bf16.mxu0 %v895
    %949 = vmatpush1.bf16.msra.mxu0 %v894
    %950 = vmatprep.subr.bf16.mxu0 %v893
    %951 = vmatpush1.bf16.msra.mxu0 %v892
    %952 = vmatprep.subr.bf16.mxu0 %v891
    %953 = vmatpush1.bf16.msra.mxu0 %v890
    %954 = vmatprep.subr.bf16.mxu0 %v889
    %955 = vmatpush1.bf16.msra.mxu0 %v888
    %956 = vmatprep.subr.bf16.mxu0 %v887
    %957 = vmatpush1.bf16.msra.mxu0 %v886
    %958 = vmatprep.subr.bf16.mxu0 %v885
    %959 = vmatpush1.bf16.msra.mxu0 %v884
    %960 = vmatprep.subr.bf16.mxu0 %v883
    %961 = vmatpush1.bf16.msra.mxu0 %v882
    %962 = vmatprep.subr.bf16.mxu0 %v913
    %963 = vmatpush2.bf16.msra.mxu0 %v912
    %964 = vmatprep.subr.bf16.mxu0 %v911
    %965 = vmatpush2.bf16.msra.mxu0 %v910
    %966 = vmatprep.subr.bf16.mxu0 %v909
    %967 = vmatpush2.bf16.msra.mxu0 %v908
    %968 = vmatprep.subr.bf16.mxu0 %v907
    %969 = vmatpush2.bf16.msra.mxu0 %v906
    %970 = vmatprep.subr.bf16.mxu0 %v905
    %971 = vmatpush2.bf16.msra.mxu0 %v904
    %972 = vmatprep.subr.bf16.mxu0 %v903
    %973 = vmatpush2.bf16.msra.mxu0 %v902
    %974 = vmatprep.subr.bf16.mxu0 %v901
    %975 = vmatpush2.bf16.msra.mxu0 %v900
    %976 = vmatprep.subr.bf16.mxu0 %v899
    %977 = vmatpush2.bf16.msra.mxu0 %v898
    %978 = vmatprep.mubr.bf16.mxu0 %v725
    %979 = vmatmul.mubr.bf16.gmra.mxu0 %v724
    %v980 = vpop.f32.mrf.mxu0
    %v981 = vadd.f32 %v779, %v980
    %v982 = vpop.f32.mrf.mxu0
    %v983 = vadd.f32 %v783, %v982
    %v984 = vpop.f32.mrf.mxu0
    %v985 = vadd.f32 %v779, %v984
    %v986 = vpop.f32.mrf.mxu0
    %v987 = vadd.f32 %v783, %v986
    %988 = vmatprep.mubr.bf16.mxu0 %v727
    %989 = vmatmul.mubr.bf16.gmra.mxu0 %v726
    %v990 = vpop.f32.mrf.mxu0
    %v991 = vadd.f32 %v779, %v990
    %v992 = vpop.f32.mrf.mxu0
    %v993 = vadd.f32 %v783, %v992
    %v994 = vpop.f32.mrf.mxu0
    %v995 = vadd.f32 %v779, %v994
    %v996 = vpop.f32.mrf.mxu0
    %v997 = vadd.f32 %v783, %v996
    %998 = vmatprep.mubr.bf16.mxu0 %v729
    %999 = vmatmul.mubr.bf16.gmra.mxu0 %v728
    %v1000 = vpop.f32.mrf.mxu0
    %v1001 = vadd.f32 %v779, %v1000
    %v1002 = vpop.f32.mrf.mxu0
    %v1003 = vadd.f32 %v783, %v1002
    %v1004 = vpop.f32.mrf.mxu0
    %v1005 = vadd.f32 %v779, %v1004
    %v1006 = vpop.f32.mrf.mxu0
    %v1007 = vadd.f32 %v783, %v1006
    %1008 = vmatprep.mubr.bf16.mxu0 %v731
    %1009 = vmatmul.mubr.bf16.gmra.mxu0 %v730
    %v1010 = vpop.f32.mrf.mxu0
    %v1011 = vadd.f32 %v779, %v1010
    %v1012 = vpop.f32.mrf.mxu0
    %v1013 = vadd.f32 %v783, %v1012
    %v1014 = vpop.f32.mrf.mxu0
    %v1015 = vadd.f32 %v779, %v1014
    %v1016 = vpop.f32.mrf.mxu0
    %v1017 = vadd.f32 %v783, %v1016
    %1018 = vmatprep.mubr.bf16.mxu0 %v733
    %1019 = vmatmul.mubr.bf16.gmra.mxu0 %v732
    %v1020 = vpop.f32.mrf.mxu0
    %v1021 = vadd.f32 %v779, %v1020
    %v1022 = vpop.f32.mrf.mxu0
    %v1023 = vadd.f32 %v783, %v1022
    %v1024 = vpop.f32.mrf.mxu0
    %v1025 = vadd.f32 %v779, %v1024
    %v1026 = vpop.f32.mrf.mxu0
    %v1027 = vadd.f32 %v783, %v1026
    %1028 = vmatprep.mubr.bf16.mxu0 %v735
    %1029 = vmatmul.mubr.bf16.gmra.mxu0 %v734
    %v1030 = vpop.f32.mrf.mxu0
    %v1031 = vadd.f32 %v779, %v1030
    %v1032 = vpop.f32.mrf.mxu0
    %v1033 = vadd.f32 %v783, %v1032
    %v1034 = vpop.f32.mrf.mxu0
    %v1035 = vadd.f32 %v779, %v1034
    %v1036 = vpop.f32.mrf.mxu0
    %v1037 = vadd.f32 %v783, %v1036
    %1038 = vmatprep.mubr.bf16.mxu0 %v737
    %1039 = vmatmul.mubr.bf16.gmra.mxu0 %v736
    %v1040 = vpop.f32.mrf.mxu0
    %v1041 = vadd.f32 %v779, %v1040
    %v1042 = vpop.f32.mrf.mxu0
    %v1043 = vadd.f32 %v783, %v1042
    %v1044 = vpop.f32.mrf.mxu0
    %v1045 = vadd.f32 %v779, %v1044
    %v1046 = vpop.f32.mrf.mxu0
    %v1047 = vadd.f32 %v783, %v1046
    %1048 = vmatprep.mubr.bf16.mxu0 %v739
    %1049 = vmatmul.mubr.bf16.gmra.mxu0 %v738
    %v1050 = vpop.f32.mrf.mxu0
    %v1051 = vadd.f32 %v779, %v1050
    %v1052 = vpop.f32.mrf.mxu0
    %v1053 = vadd.f32 %v783, %v1052
    %v1054 = vpop.f32.mrf.mxu0
    %v1055 = vadd.f32 %v779, %v1054
    %v1056 = vpop.f32.mrf.mxu0
    %v1057 = vadd.f32 %v783, %v1056
    %1058 = vdwg.mxu0
    %v1059 = vmax.f32 %v981, 0.0
    %v1060 = vmax.f32 %v983, 0.0
    %v1061 = vmax.f32 %v985, 0.0
    %v1062 = vmax.f32 %v987, 0.0
    %v1063 = vmax.f32 %v991, 0.0
    %v1064 = vmax.f32 %v993, 0.0
    %v1065 = vmax.f32 %v995, 0.0
    %v1066 = vmax.f32 %v997, 0.0
    %v1067 = vmax.f32 %v1001, 0.0
    %v1068 = vmax.f32 %v1003, 0.0
    %v1069 = vmax.f32 %v1005, 0.0
    %v1070 = vmax.f32 %v1007, 0.0
    %v1071 = vmax.f32 %v1011, 0.0
    %v1072 = vmax.f32 %v1013, 0.0
    %v1073 = vmax.f32 %v1015, 0.0
    %v1074 = vmax.f32 %v1017, 0.0
    %v1075 = vmax.f32 %v1021, 0.0
    %v1076 = vmax.f32 %v1023, 0.0
    %v1077 = vmax.f32 %v1025, 0.0
    %v1078 = vmax.f32 %v1027, 0.0
    %v1079 = vmax.f32 %v1031, 0.0
    %v1080 = vmax.f32 %v1033, 0.0
    %v1081 = vmax.f32 %v1035, 0.0
    %v1082 = vmax.f32 %v1037, 0.0
    %v1083 = vmax.f32 %v1041, 0.0
    %v1084 = vmax.f32 %v1043, 0.0
    %v1085 = vmax.f32 %v1045, 0.0
    %v1086 = vmax.f32 %v1047, 0.0
    %v1087 = vmax.f32 %v1051, 0.0
    %v1088 = vmax.f32 %v1053, 0.0
    %v1089 = vmax.f32 %v1055, 0.0
    %v1090 = vmax.f32 %v1057, 0.0
    %v1091 = vpack.c.bf16 %v1061, %v1059
    %v1092 = vpack.c.bf16 %v1062, %v1060
    %v1093 = vpack.c.bf16 %v1065, %v1063
    %v1094 = vpack.c.bf16 %v1066, %v1064
    %v1095 = vpack.c.bf16 %v1069, %v1067
    %v1096 = vpack.c.bf16 %v1070, %v1068
    %v1097 = vpack.c.bf16 %v1073, %v1071
    %v1098 = vpack.c.bf16 %v1074, %v1072
    %v1099 = vpack.c.bf16 %v1077, %v1075
    %v1100 = vpack.c.bf16 %v1078, %v1076
    %v1101 = vpack.c.bf16 %v1081, %v1079
    %v1102 = vpack.c.bf16 %v1082, %v1080
    %v1103 = vpack.c.bf16 %v1085, %v1083
    %v1104 = vpack.c.bf16 %v1086, %v1084
    %v1105 = vpack.c.bf16 %v1089, %v1087
    %v1106 = vpack.c.bf16 %v1090, %v1088
    %s1107 = scalar_lea.vmem [#allocation2], 512
    %v1108 = vld [vmem:[%s1107] sm:$0xff]
    %v1109 = vld [vmem:[%s1107 + $0x8] sm:$0xff]
    %v1110 = vld [vmem:[%s1107 + $0x10] sm:$0xff]
    %v1111 = vld [vmem:[%s1107 + $0x18] sm:$0xff]
    %v1112 = vld [vmem:[%s1107 + $0x20] sm:$0xff]
    %v1113 = vld [vmem:[%s1107 + $0x28] sm:$0xff]
    %v1114 = vld [vmem:[%s1107 + $0x30] sm:$0xff]
    %v1115 = vld [vmem:[%s1107 + $0x38] sm:$0xff]
    %v1116 = vld [vmem:[%s1107 + $0x40] sm:$0xff]
    %v1117 = vld [vmem:[%s1107 + $0x48] sm:$0xff]
    %v1118 = vld [vmem:[%s1107 + $0x50] sm:$0xff]
    %v1119 = vld [vmem:[%s1107 + $0x58] sm:$0xff]
    %v1120 = vld [vmem:[%s1107 + $0x60] sm:$0xff]
    %v1121 = vld [vmem:[%s1107 + $0x68] sm:$0xff]
    %v1122 = vld [vmem:[%s1107 + $0x70] sm:$0xff]
    %v1123 = vld [vmem:[%s1107 + $0x78] sm:$0xff]
    %v1124 = vld [vmem:[%s1107 + $0x80] sm:$0xff]
    %v1125 = vld [vmem:[%s1107 + $0x88] sm:$0xff]
    %v1126 = vld [vmem:[%s1107 + $0x90] sm:$0xff]
    %v1127 = vld [vmem:[%s1107 + $0x98] sm:$0xff]
    %v1128 = vld [vmem:[%s1107 + $0xa0] sm:$0xff]
    %v1129 = vld [vmem:[%s1107 + $0xa8] sm:$0xff]
    %v1130 = vld [vmem:[%s1107 + $0xb0] sm:$0xff]
    %v1131 = vld [vmem:[%s1107 + $0xb8] sm:$0xff]
    %v1132 = vld [vmem:[%s1107 + $0xc0] sm:$0xff]
    %v1133 = vld [vmem:[%s1107 + $0xc8] sm:$0xff]
    %v1134 = vld [vmem:[%s1107 + $0xd0] sm:$0xff]
    %v1135 = vld [vmem:[%s1107 + $0xd8] sm:$0xff]
    %v1136 = vld [vmem:[%s1107 + $0xe0] sm:$0xff]
    %v1137 = vld [vmem:[%s1107 + $0xe8] sm:$0xff]
    %v1138 = vld [vmem:[%s1107 + $0xf0] sm:$0xff]
    %v1139 = vld [vmem:[%s1107 + $0xf8] sm:$0xff]
    %s1140 = scalar_lea.vmem %s4, 6
    %v1141 = vld [vmem:[%s1140] sm:$0x3]
    %v1143 = vlaneseq
    %v1144 = vshrl.u32 %v1143, 7
    %v1145 = vsub.s32 0, %v1144
    %v1146 = vrot.slane %v1141, %v1145
    %v1147 = vlaneseq
    %v1148 = vshrl.u32 %v1147, 7
    %v1149 = vsub.s32 1, %v1148
    %v1150 = vrot.slane %v1141, %v1149
    %v1185 = vunpack.c.l.b16 %v1108
    %v1186 = vunpack.c.h.b16 %v1108
    %v1187 = vunpack.c.l.b16 %v1109
    %v1188 = vunpack.c.h.b16 %v1109
    %v1189 = vunpack.c.l.b16 %v1110
    %v1190 = vunpack.c.h.b16 %v1110
    %v1191 = vunpack.c.l.b16 %v1111
    %v1192 = vunpack.c.h.b16 %v1111
    %v1193 = vunpack.c.l.b16 %v1112
    %v1194 = vunpack.c.h.b16 %v1112
    %v1195 = vunpack.c.l.b16 %v1113
    %v1196 = vunpack.c.h.b16 %v1113
    %v1197 = vunpack.c.l.b16 %v1114
    %v1198 = vunpack.c.h.b16 %v1114
    %v1199 = vunpack.c.l.b16 %v1115
    %v1200 = vunpack.c.h.b16 %v1115
    %v1201 = vunpack.c.l.b16 %v1116
    %v1202 = vunpack.c.h.b16 %v1116
    %v1203 = vunpack.c.l.b16 %v1117
    %v1204 = vunpack.c.h.b16 %v1117
    %v1205 = vunpack.c.l.b16 %v1118
    %v1206 = vunpack.c.h.b16 %v1118
    %v1207 = vunpack.c.l.b16 %v1119
    %v1208 = vunpack.c.h.b16 %v1119
    %v1209 = vunpack.c.l.b16 %v1120
    %v1210 = vunpack.c.h.b16 %v1120
    %v1211 = vunpack.c.l.b16 %v1121
    %v1212 = vunpack.c.h.b16 %v1121
    %v1213 = vunpack.c.l.b16 %v1122
    %v1214 = vunpack.c.h.b16 %v1122
    %v1215 = vunpack.c.l.b16 %v1123
    %v1216 = vunpack.c.h.b16 %v1123
    %v1217 = vunpack.c.l.b16 %v1124
    %v1218 = vunpack.c.h.b16 %v1124
    %v1219 = vunpack.c.l.b16 %v1125
    %v1220 = vunpack.c.h.b16 %v1125
    %v1221 = vunpack.c.l.b16 %v1126
    %v1222 = vunpack.c.h.b16 %v1126
    %v1223 = vunpack.c.l.b16 %v1127
    %v1224 = vunpack.c.h.b16 %v1127
    %v1225 = vunpack.c.l.b16 %v1128
    %v1226 = vunpack.c.h.b16 %v1128
    %v1227 = vunpack.c.l.b16 %v1129
    %v1228 = vunpack.c.h.b16 %v1129
    %v1229 = vunpack.c.l.b16 %v1130
    %v1230 = vunpack.c.h.b16 %v1130
    %v1231 = vunpack.c.l.b16 %v1131
    %v1232 = vunpack.c.h.b16 %v1131
    %v1233 = vunpack.c.l.b16 %v1132
    %v1234 = vunpack.c.h.b16 %v1132
    %v1235 = vunpack.c.l.b16 %v1133
    %v1236 = vunpack.c.h.b16 %v1133
    %v1237 = vunpack.c.l.b16 %v1134
    %v1238 = vunpack.c.h.b16 %v1134
    %v1239 = vunpack.c.l.b16 %v1135
    %v1240 = vunpack.c.h.b16 %v1135
    %v1241 = vunpack.c.l.b16 %v1136
    %v1242 = vunpack.c.h.b16 %v1136
    %v1243 = vunpack.c.l.b16 %v1137
    %v1244 = vunpack.c.h.b16 %v1137
    %v1245 = vunpack.c.l.b16 %v1138
    %v1246 = vunpack.c.h.b16 %v1138
    %v1247 = vunpack.c.l.b16 %v1139
    %v1248 = vunpack.c.h.b16 %v1139
    %v1249 = vpack.c.b16 %v1187, %v1185
    %v1250 = vpack.c.b16 %v1188, %v1186
    %v1251 = vpack.c.b16 %v1191, %v1189
    %v1252 = vpack.c.b16 %v1192, %v1190
    %v1253 = vpack.c.b16 %v1195, %v1193
    %v1254 = vpack.c.b16 %v1196, %v1194
    %v1255 = vpack.c.b16 %v1199, %v1197
    %v1256 = vpack.c.b16 %v1200, %v1198
    %v1257 = vpack.c.b16 %v1203, %v1201
    %v1258 = vpack.c.b16 %v1204, %v1202
    %v1259 = vpack.c.b16 %v1207, %v1205
    %v1260 = vpack.c.b16 %v1208, %v1206
    %v1261 = vpack.c.b16 %v1211, %v1209
    %v1262 = vpack.c.b16 %v1212, %v1210
    %v1263 = vpack.c.b16 %v1215, %v1213
    %v1264 = vpack.c.b16 %v1216, %v1214
    %v1265 = vpack.c.b16 %v1219, %v1217
    %v1266 = vpack.c.b16 %v1220, %v1218
    %v1267 = vpack.c.b16 %v1223, %v1221
    %v1268 = vpack.c.b16 %v1224, %v1222
    %v1269 = vpack.c.b16 %v1227, %v1225
    %v1270 = vpack.c.b16 %v1228, %v1226
    %v1271 = vpack.c.b16 %v1231, %v1229
    %v1272 = vpack.c.b16 %v1232, %v1230
    %v1273 = vpack.c.b16 %v1235, %v1233
    %v1274 = vpack.c.b16 %v1236, %v1234
    %v1275 = vpack.c.b16 %v1239, %v1237
    %v1276 = vpack.c.b16 %v1240, %v1238
    %v1277 = vpack.c.b16 %v1243, %v1241
    %v1278 = vpack.c.b16 %v1244, %v1242
    %v1279 = vpack.c.b16 %v1247, %v1245
    %v1280 = vpack.c.b16 %v1248, %v1246
    %1313 = vmatprep.subr.bf16.mxu0 %v1264
    %1314 = vmatpush1.bf16.msra.mxu0 %v1263
    %1315 = vmatprep.subr.bf16.mxu0 %v1262
    %1316 = vmatpush1.bf16.msra.mxu0 %v1261
    %1317 = vmatprep.subr.bf16.mxu0 %v1260
    %1318 = vmatpush1.bf16.msra.mxu0 %v1259
    %1319 = vmatprep.subr.bf16.mxu0 %v1258
    %1320 = vmatpush1.bf16.msra.mxu0 %v1257
    %1321 = vmatprep.subr.bf16.mxu0 %v1256
    %1322 = vmatpush1.bf16.msra.mxu0 %v1255
    %1323 = vmatprep.subr.bf16.mxu0 %v1254
    %1324 = vmatpush1.bf16.msra.mxu0 %v1253
    %1325 = vmatprep.subr.bf16.mxu0 %v1252
    %1326 = vmatpush1.bf16.msra.mxu0 %v1251
    %1327 = vmatprep.subr.bf16.mxu0 %v1250
    %1328 = vmatpush1.bf16.msra.mxu0 %v1249
    %1329 = vmatprep.subr.bf16.mxu0 %v1280
    %1330 = vmatpush2.bf16.msra.mxu0 %v1279
    %1331 = vmatprep.subr.bf16.mxu0 %v1278
    %1332 = vmatpush2.bf16.msra.mxu0 %v1277
    %1333 = vmatprep.subr.bf16.mxu0 %v1276
    %1334 = vmatpush2.bf16.msra.mxu0 %v1275
    %1335 = vmatprep.subr.bf16.mxu0 %v1274
    %1336 = vmatpush2.bf16.msra.mxu0 %v1273
    %1337 = vmatprep.subr.bf16.mxu0 %v1272
    %1338 = vmatpush2.bf16.msra.mxu0 %v1271
    %1339 = vmatprep.subr.bf16.mxu0 %v1270
    %1340 = vmatpush2.bf16.msra.mxu0 %v1269
    %1341 = vmatprep.subr.bf16.mxu0 %v1268
    %1342 = vmatpush2.bf16.msra.mxu0 %v1267
    %1343 = vmatprep.subr.bf16.mxu0 %v1266
    %1344 = vmatpush2.bf16.msra.mxu0 %v1265
    %1345 = vmatprep.mubr.bf16.mxu0 %v1092
    %1346 = vmatmul.mubr.bf16.gmra.mxu0 %v1091
    %v1347 = vpop.f32.mrf.mxu0
    %v1348 = vadd.f32 %v1146, %v1347
    %v1349 = vpop.f32.mrf.mxu0
    %v1350 = vadd.f32 %v1150, %v1349
    %v1351 = vpop.f32.mrf.mxu0
    %v1352 = vadd.f32 %v1146, %v1351
    %v1353 = vpop.f32.mrf.mxu0
    %v1354 = vadd.f32 %v1150, %v1353
    %1355 = vmatprep.mubr.bf16.mxu0 %v1094
    %1356 = vmatmul.mubr.bf16.gmra.mxu0 %v1093
    %v1357 = vpop.f32.mrf.mxu0
    %v1358 = vadd.f32 %v1146, %v1357
    %v1359 = vpop.f32.mrf.mxu0
    %v1360 = vadd.f32 %v1150, %v1359
    %v1361 = vpop.f32.mrf.mxu0
    %v1362 = vadd.f32 %v1146, %v1361
    %v1363 = vpop.f32.mrf.mxu0
    %v1364 = vadd.f32 %v1150, %v1363
    %1365 = vmatprep.mubr.bf16.mxu0 %v1096
    %1366 = vmatmul.mubr.bf16.gmra.mxu0 %v1095
    %v1367 = vpop.f32.mrf.mxu0
    %v1368 = vadd.f32 %v1146, %v1367
    %v1369 = vpop.f32.mrf.mxu0
    %v1370 = vadd.f32 %v1150, %v1369
    %v1371 = vpop.f32.mrf.mxu0
    %v1372 = vadd.f32 %v1146, %v1371
    %v1373 = vpop.f32.mrf.mxu0
    %v1374 = vadd.f32 %v1150, %v1373
    %1375 = vmatprep.mubr.bf16.mxu0 %v1098
    %1376 = vmatmul.mubr.bf16.gmra.mxu0 %v1097
    %v1377 = vpop.f32.mrf.mxu0
    %v1378 = vadd.f32 %v1146, %v1377
    %v1379 = vpop.f32.mrf.mxu0
    %v1380 = vadd.f32 %v1150, %v1379
    %v1381 = vpop.f32.mrf.mxu0
    %v1382 = vadd.f32 %v1146, %v1381
    %v1383 = vpop.f32.mrf.mxu0
    %v1384 = vadd.f32 %v1150, %v1383
    %1385 = vmatprep.mubr.bf16.mxu0 %v1100
    %1386 = vmatmul.mubr.bf16.gmra.mxu0 %v1099
    %v1387 = vpop.f32.mrf.mxu0
    %v1388 = vadd.f32 %v1146, %v1387
    %v1389 = vpop.f32.mrf.mxu0
    %v1390 = vadd.f32 %v1150, %v1389
    %v1391 = vpop.f32.mrf.mxu0
    %v1392 = vadd.f32 %v1146, %v1391
    %v1393 = vpop.f32.mrf.mxu0
    %v1394 = vadd.f32 %v1150, %v1393
    %1395 = vmatprep.mubr.bf16.mxu0 %v1102
    %1396 = vmatmul.mubr.bf16.gmra.mxu0 %v1101
    %v1397 = vpop.f32.mrf.mxu0
    %v1398 = vadd.f32 %v1146, %v1397
    %v1399 = vpop.f32.mrf.mxu0
    %v1400 = vadd.f32 %v1150, %v1399
    %v1401 = vpop.f32.mrf.mxu0
    %v1402 = vadd.f32 %v1146, %v1401
    %v1403 = vpop.f32.mrf.mxu0
    %v1404 = vadd.f32 %v1150, %v1403
    %1405 = vmatprep.mubr.bf16.mxu0 %v1104
    %1406 = vmatmul.mubr.bf16.gmra.mxu0 %v1103
    %v1407 = vpop.f32.mrf.mxu0
    %v1408 = vadd.f32 %v1146, %v1407
    %v1409 = vpop.f32.mrf.mxu0
    %v1410 = vadd.f32 %v1150, %v1409
    %v1411 = vpop.f32.mrf.mxu0
    %v1412 = vadd.f32 %v1146, %v1411
    %v1413 = vpop.f32.mrf.mxu0
    %v1414 = vadd.f32 %v1150, %v1413
    %1415 = vmatprep.mubr.bf16.mxu0 %v1106
    %1416 = vmatmul.mubr.bf16.gmra.mxu0 %v1105
    %v1417 = vpop.f32.mrf.mxu0
    %v1418 = vadd.f32 %v1146, %v1417
    %v1419 = vpop.f32.mrf.mxu0
    %v1420 = vadd.f32 %v1150, %v1419
    %v1421 = vpop.f32.mrf.mxu0
    %v1422 = vadd.f32 %v1146, %v1421
    %v1423 = vpop.f32.mrf.mxu0
    %v1424 = vadd.f32 %v1150, %v1423
    %1425 = vdwg.mxu0
    %v1426 = vmax.f32 %v1348, 0.0
    %v1427 = vmax.f32 %v1350, 0.0
    %v1428 = vmax.f32 %v1352, 0.0
    %v1429 = vmax.f32 %v1354, 0.0
    %v1430 = vmax.f32 %v1358, 0.0
    %v1431 = vmax.f32 %v1360, 0.0
    %v1432 = vmax.f32 %v1362, 0.0
    %v1433 = vmax.f32 %v1364, 0.0
    %v1434 = vmax.f32 %v1368, 0.0
    %v1435 = vmax.f32 %v1370, 0.0
    %v1436 = vmax.f32 %v1372, 0.0
    %v1437 = vmax.f32 %v1374, 0.0
    %v1438 = vmax.f32 %v1378, 0.0
    %v1439 = vmax.f32 %v1380, 0.0
    %v1440 = vmax.f32 %v1382, 0.0
    %v1441 = vmax.f32 %v1384, 0.0
    %v1442 = vmax.f32 %v1388, 0.0
    %v1443 = vmax.f32 %v1390, 0.0
    %v1444 = vmax.f32 %v1392, 0.0
    %v1445 = vmax.f32 %v1394, 0.0
    %v1446 = vmax.f32 %v1398, 0.0
    %v1447 = vmax.f32 %v1400, 0.0
    %v1448 = vmax.f32 %v1402, 0.0
    %v1449 = vmax.f32 %v1404, 0.0
    %v1450 = vmax.f32 %v1408, 0.0
    %v1451 = vmax.f32 %v1410, 0.0
    %v1452 = vmax.f32 %v1412, 0.0
    %v1453 = vmax.f32 %v1414, 0.0
    %v1454 = vmax.f32 %v1418, 0.0
    %v1455 = vmax.f32 %v1420, 0.0
    %v1456 = vmax.f32 %v1422, 0.0
    %v1457 = vmax.f32 %v1424, 0.0
    %v1458 = vpack.c.bf16 %v1428, %v1426
    %v1459 = vpack.c.bf16 %v1429, %v1427
    %v1460 = vpack.c.bf16 %v1432, %v1430
    %v1461 = vpack.c.bf16 %v1433, %v1431
    %v1462 = vpack.c.bf16 %v1436, %v1434
    %v1463 = vpack.c.bf16 %v1437, %v1435
    %v1464 = vpack.c.bf16 %v1440, %v1438
    %v1465 = vpack.c.bf16 %v1441, %v1439
    %v1466 = vpack.c.bf16 %v1444, %v1442
    %v1467 = vpack.c.bf16 %v1445, %v1443
    %v1468 = vpack.c.bf16 %v1448, %v1446
    %v1469 = vpack.c.bf16 %v1449, %v1447
    %v1470 = vpack.c.bf16 %v1452, %v1450
    %v1471 = vpack.c.bf16 %v1453, %v1451
    %v1472 = vpack.c.bf16 %v1456, %v1454
    %v1473 = vpack.c.bf16 %v1457, %v1455
    %s1474 = scalar_lea.vmem %s2, 128
    %v1475 = vld [vmem:[%s1474] sm:$0xff]
    %v1476 = vld [vmem:[%s1474 + $0x8] sm:$0xff]
    %v1477 = vld [vmem:[%s1474 + $0x10] sm:$0xff]
    %v1478 = vld [vmem:[%s1474 + $0x18] sm:$0xff]
    %v1479 = vld [vmem:[%s1474 + $0x20] sm:$0xff]
    %v1480 = vld [vmem:[%s1474 + $0x28] sm:$0xff]
    %v1481 = vld [vmem:[%s1474 + $0x30] sm:$0xff]
    %v1482 = vld [vmem:[%s1474 + $0x38] sm:$0xff]
    %v1483 = vld [vmem:[%s1474 + $0x40] sm:$0xff]
    %v1484 = vld [vmem:[%s1474 + $0x48] sm:$0xff]
    %v1485 = vld [vmem:[%s1474 + $0x50] sm:$0xff]
    %v1486 = vld [vmem:[%s1474 + $0x58] sm:$0xff]
    %v1487 = vld [vmem:[%s1474 + $0x60] sm:$0xff]
    %v1488 = vld [vmem:[%s1474 + $0x68] sm:$0xff]
    %v1489 = vld [vmem:[%s1474 + $0x70] sm:$0xff]
    %v1490 = vld [vmem:[%s1474 + $0x78] sm:$0xff]
    %s1491 = scalar_lea.vmem [#allocation2], 768
    %v1492 = vld [vmem:[%s1491] sm:$0xff]
    %v1493 = vld [vmem:[%s1491 + $0x8] sm:$0xff]
    %v1494 = vld [vmem:[%s1491 + $0x10] sm:$0xff]
    %v1495 = vld [vmem:[%s1491 + $0x18] sm:$0xff]
    %v1496 = vld [vmem:[%s1491 + $0x20] sm:$0xff]
    %v1497 = vld [vmem:[%s1491 + $0x28] sm:$0xff]
    %v1498 = vld [vmem:[%s1491 + $0x30] sm:$0xff]
    %v1499 = vld [vmem:[%s1491 + $0x38] sm:$0xff]
    %v1500 = vld [vmem:[%s1491 + $0x40] sm:$0xff]
    %v1501 = vld [vmem:[%s1491 + $0x48] sm:$0xff]
    %v1502 = vld [vmem:[%s1491 + $0x50] sm:$0xff]
    %v1503 = vld [vmem:[%s1491 + $0x58] sm:$0xff]
    %v1504 = vld [vmem:[%s1491 + $0x60] sm:$0xff]
    %v1505 = vld [vmem:[%s1491 + $0x68] sm:$0xff]
    %v1506 = vld [vmem:[%s1491 + $0x70] sm:$0xff]
    %v1507 = vld [vmem:[%s1491 + $0x78] sm:$0xff]
    %v1508 = vld [vmem:[%s1491 + $0x80] sm:$0xff]
    %v1509 = vld [vmem:[%s1491 + $0x88] sm:$0xff]
    %v1510 = vld [vmem:[%s1491 + $0x90] sm:$0xff]
    %v1511 = vld [vmem:[%s1491 + $0x98] sm:$0xff]
    %v1512 = vld [vmem:[%s1491 + $0xa0] sm:$0xff]
    %v1513 = vld [vmem:[%s1491 + $0xa8] sm:$0xff]
    %v1514 = vld [vmem:[%s1491 + $0xb0] sm:$0xff]
    %v1515 = vld [vmem:[%s1491 + $0xb8] sm:$0xff]
    %v1516 = vld [vmem:[%s1491 + $0xc0] sm:$0xff]
    %v1517 = vld [vmem:[%s1491 + $0xc8] sm:$0xff]
    %v1518 = vld [vmem:[%s1491 + $0xd0] sm:$0xff]
    %v1519 = vld [vmem:[%s1491 + $0xd8] sm:$0xff]
    %v1520 = vld [vmem:[%s1491 + $0xe0] sm:$0xff]
    %v1521 = vld [vmem:[%s1491 + $0xe8] sm:$0xff]
    %v1522 = vld [vmem:[%s1491 + $0xf0] sm:$0xff]
    %v1523 = vld [vmem:[%s1491 + $0xf8] sm:$0xff]
    %v1556 = vunpack.c.l.b16 %v1492
    %v1557 = vunpack.c.h.b16 %v1492
    %v1558 = vunpack.c.l.b16 %v1493
    %v1559 = vunpack.c.h.b16 %v1493
    %v1560 = vunpack.c.l.b16 %v1494
    %v1561 = vunpack.c.h.b16 %v1494
    %v1562 = vunpack.c.l.b16 %v1495
    %v1563 = vunpack.c.h.b16 %v1495
    %v1564 = vunpack.c.l.b16 %v1496
    %v1565 = vunpack.c.h.b16 %v1496
    %v1566 = vunpack.c.l.b16 %v1497
    %v1567 = vunpack.c.h.b16 %v1497
    %v1568 = vunpack.c.l.b16 %v1498
    %v1569 = vunpack.c.h.b16 %v1498
    %v1570 = vunpack.c.l.b16 %v1499
    %v1571 = vunpack.c.h.b16 %v1499
    %v1572 = vunpack.c.l.b16 %v1500
    %v1573 = vunpack.c.h.b16 %v1500
    %v1574 = vunpack.c.l.b16 %v1501
    %v1575 = vunpack.c.h.b16 %v1501
    %v1576 = vunpack.c.l.b16 %v1502
    %v1577 = vunpack.c.h.b16 %v1502
    %v1578 = vunpack.c.l.b16 %v1503
    %v1579 = vunpack.c.h.b16 %v1503
    %v1580 = vunpack.c.l.b16 %v1504
    %v1581 = vunpack.c.h.b16 %v1504
    %v1582 = vunpack.c.l.b16 %v1505
    %v1583 = vunpack.c.h.b16 %v1505
    %v1584 = vunpack.c.l.b16 %v1506
    %v1585 = vunpack.c.h.b16 %v1506
    %v1586 = vunpack.c.l.b16 %v1507
    %v1587 = vunpack.c.h.b16 %v1507
    %v1588 = vunpack.c.l.b16 %v1508
    %v1589 = vunpack.c.h.b16 %v1508
    %v1590 = vunpack.c.l.b16 %v1509
    %v1591 = vunpack.c.h.b16 %v1509
    %v1592 = vunpack.c.l.b16 %v1510
    %v1593 = vunpack.c.h.b16 %v1510
    %v1594 = vunpack.c.l.b16 %v1511
    %v1595 = vunpack.c.h.b16 %v1511
    %v1596 = vunpack.c.l.b16 %v1512
    %v1597 = vunpack.c.h.b16 %v1512
    %v1598 = vunpack.c.l.b16 %v1513
    %v1599 = vunpack.c.h.b16 %v1513
    %v1600 = vunpack.c.l.b16 %v1514
    %v1601 = vunpack.c.h.b16 %v1514
    %v1602 = vunpack.c.l.b16 %v1515
    %v1603 = vunpack.c.h.b16 %v1515
    %v1604 = vunpack.c.l.b16 %v1516
    %v1605 = vunpack.c.h.b16 %v1516
    %v1606 = vunpack.c.l.b16 %v1517
    %v1607 = vunpack.c.h.b16 %v1517
    %v1608 = vunpack.c.l.b16 %v1518
    %v1609 = vunpack.c.h.b16 %v1518
    %v1610 = vunpack.c.l.b16 %v1519
    %v1611 = vunpack.c.h.b16 %v1519
    %v1612 = vunpack.c.l.b16 %v1520
    %v1613 = vunpack.c.h.b16 %v1520
    %v1614 = vunpack.c.l.b16 %v1521
    %v1615 = vunpack.c.h.b16 %v1521
    %v1616 = vunpack.c.l.b16 %v1522
    %v1617 = vunpack.c.h.b16 %v1522
    %v1618 = vunpack.c.l.b16 %v1523
    %v1619 = vunpack.c.h.b16 %v1523
    %v1620 = vpack.c.b16 %v1558, %v1556
    %v1621 = vpack.c.b16 %v1559, %v1557
    %v1622 = vpack.c.b16 %v1562, %v1560
    %v1623 = vpack.c.b16 %v1563, %v1561
    %v1624 = vpack.c.b16 %v1566, %v1564
    %v1625 = vpack.c.b16 %v1567, %v1565
    %v1626 = vpack.c.b16 %v1570, %v1568
    %v1627 = vpack.c.b16 %v1571, %v1569
    %v1628 = vpack.c.b16 %v1574, %v1572
    %v1629 = vpack.c.b16 %v1575, %v1573
    %v1630 = vpack.c.b16 %v1578, %v1576
    %v1631 = vpack.c.b16 %v1579, %v1577
    %v1632 = vpack.c.b16 %v1582, %v1580
    %v1633 = vpack.c.b16 %v1583, %v1581
    %v1634 = vpack.c.b16 %v1586, %v1584
    %v1635 = vpack.c.b16 %v1587, %v1585
    %v1636 = vpack.c.b16 %v1590, %v1588
    %v1637 = vpack.c.b16 %v1591, %v1589
    %v1638 = vpack.c.b16 %v1594, %v1592
    %v1639 = vpack.c.b16 %v1595, %v1593
    %v1640 = vpack.c.b16 %v1598, %v1596
    %v1641 = vpack.c.b16 %v1599, %v1597
    %v1642 = vpack.c.b16 %v1602, %v1600
    %v1643 = vpack.c.b16 %v1603, %v1601
    %v1644 = vpack.c.b16 %v1606, %v1604
    %v1645 = vpack.c.b16 %v1607, %v1605
    %v1646 = vpack.c.b16 %v1610, %v1608
    %v1647 = vpack.c.b16 %v1611, %v1609
    %v1648 = vpack.c.b16 %v1614, %v1612
    %v1649 = vpack.c.b16 %v1615, %v1613
    %v1650 = vpack.c.b16 %v1618, %v1616
    %v1651 = vpack.c.b16 %v1619, %v1617
    %1684 = vmatprep.subr.bf16.mxu0 %v1635
    %1685 = vmatpush1.bf16.msra.mxu0 %v1634
    %1686 = vmatprep.subr.bf16.mxu0 %v1633
    %1687 = vmatpush1.bf16.msra.mxu0 %v1632
    %1688 = vmatprep.subr.bf16.mxu0 %v1631
    %1689 = vmatpush1.bf16.msra.mxu0 %v1630
    %1690 = vmatprep.subr.bf16.mxu0 %v1629
    %1691 = vmatpush1.bf16.msra.mxu0 %v1628
    %1692 = vmatprep.subr.bf16.mxu0 %v1627
    %1693 = vmatpush1.bf16.msra.mxu0 %v1626
    %1694 = vmatprep.subr.bf16.mxu0 %v1625
    %1695 = vmatpush1.bf16.msra.mxu0 %v1624
    %1696 = vmatprep.subr.bf16.mxu0 %v1623
    %1697 = vmatpush1.bf16.msra.mxu0 %v1622
    %1698 = vmatprep.subr.bf16.mxu0 %v1621
    %1699 = vmatpush1.bf16.msra.mxu0 %v1620
    %1700 = vmatprep.subr.bf16.mxu0 %v1651
    %1701 = vmatpush2.bf16.msra.mxu0 %v1650
    %1702 = vmatprep.subr.bf16.mxu0 %v1649
    %1703 = vmatpush2.bf16.msra.mxu0 %v1648
    %1704 = vmatprep.subr.bf16.mxu0 %v1647
    %1705 = vmatpush2.bf16.msra.mxu0 %v1646
    %1706 = vmatprep.subr.bf16.mxu0 %v1645
    %1707 = vmatpush2.bf16.msra.mxu0 %v1644
    %1708 = vmatprep.subr.bf16.mxu0 %v1643
    %1709 = vmatpush2.bf16.msra.mxu0 %v1642
    %1710 = vmatprep.subr.bf16.mxu0 %v1641
    %1711 = vmatpush2.bf16.msra.mxu0 %v1640
    %1712 = vmatprep.subr.bf16.mxu0 %v1639
    %1713 = vmatpush2.bf16.msra.mxu0 %v1638
    %1714 = vmatprep.subr.bf16.mxu0 %v1637
    %1715 = vmatpush2.bf16.msra.mxu0 %v1636
    %1716 = vmatprep.mubr.bf16.mxu0 %v1459
    %1717 = vmatmul.mubr.bf16.gmra.mxu0 %v1458
    %v1718 = vpop.f32.mrf.mxu0
    %v1719 = vadd.f32 0.0, %v1718
    %v1720 = vpop.f32.mrf.mxu0
    %v1721 = vadd.f32 0.0, %v1720
    %v1722 = vpop.f32.mrf.mxu0
    %v1723 = vadd.f32 0.0, %v1722
    %v1724 = vpop.f32.mrf.mxu0
    %v1725 = vadd.f32 0.0, %v1724
    %1726 = vmatprep.mubr.bf16.mxu0 %v1461
    %1727 = vmatmul.mubr.bf16.gmra.mxu0 %v1460
    %v1728 = vpop.f32.mrf.mxu0
    %v1729 = vadd.f32 0.0, %v1728
    %v1730 = vpop.f32.mrf.mxu0
    %v1731 = vadd.f32 0.0, %v1730
    %v1732 = vpop.f32.mrf.mxu0
    %v1733 = vadd.f32 0.0, %v1732
    %v1734 = vpop.f32.mrf.mxu0
    %v1735 = vadd.f32 0.0, %v1734
    %1736 = vmatprep.mubr.bf16.mxu0 %v1463
    %1737 = vmatmul.mubr.bf16.gmra.mxu0 %v1462
    %v1738 = vpop.f32.mrf.mxu0
    %v1739 = vadd.f32 0.0, %v1738
    %v1740 = vpop.f32.mrf.mxu0
    %v1741 = vadd.f32 0.0, %v1740
    %v1742 = vpop.f32.mrf.mxu0
    %v1743 = vadd.f32 0.0, %v1742
    %v1744 = vpop.f32.mrf.mxu0
    %v1745 = vadd.f32 0.0, %v1744
    %1746 = vmatprep.mubr.bf16.mxu0 %v1465
    %1747 = vmatmul.mubr.bf16.gmra.mxu0 %v1464
    %v1748 = vpop.f32.mrf.mxu0
    %v1749 = vadd.f32 0.0, %v1748
    %v1750 = vpop.f32.mrf.mxu0
    %v1751 = vadd.f32 0.0, %v1750
    %v1752 = vpop.f32.mrf.mxu0
    %v1753 = vadd.f32 0.0, %v1752
    %v1754 = vpop.f32.mrf.mxu0
    %v1755 = vadd.f32 0.0, %v1754
    %1756 = vmatprep.mubr.bf16.mxu0 %v1467
    %1757 = vmatmul.mubr.bf16.gmra.mxu0 %v1466
    %v1758 = vpop.f32.mrf.mxu0
    %v1759 = vadd.f32 0.0, %v1758
    %v1760 = vpop.f32.mrf.mxu0
    %v1761 = vadd.f32 0.0, %v1760
    %v1762 = vpop.f32.mrf.mxu0
    %v1763 = vadd.f32 0.0, %v1762
    %v1764 = vpop.f32.mrf.mxu0
    %v1765 = vadd.f32 0.0, %v1764
    %1766 = vmatprep.mubr.bf16.mxu0 %v1469
    %1767 = vmatmul.mubr.bf16.gmra.mxu0 %v1468
    %v1768 = vpop.f32.mrf.mxu0
    %v1769 = vadd.f32 0.0, %v1768
    %v1770 = vpop.f32.mrf.mxu0
    %v1771 = vadd.f32 0.0, %v1770
    %v1772 = vpop.f32.mrf.mxu0
    %v1773 = vadd.f32 0.0, %v1772
    %v1774 = vpop.f32.mrf.mxu0
    %v1775 = vadd.f32 0.0, %v1774
    %1776 = vmatprep.mubr.bf16.mxu0 %v1471
    %1777 = vmatmul.mubr.bf16.gmra.mxu0 %v1470
    %v1778 = vpop.f32.mrf.mxu0
    %v1779 = vadd.f32 0.0, %v1778
    %v1780 = vpop.f32.mrf.mxu0
    %v1781 = vadd.f32 0.0, %v1780
    %v1782 = vpop.f32.mrf.mxu0
    %v1783 = vadd.f32 0.0, %v1782
    %v1784 = vpop.f32.mrf.mxu0
    %v1785 = vadd.f32 0.0, %v1784
    %1786 = vmatprep.mubr.bf16.mxu0 %v1473
    %1787 = vmatmul.mubr.bf16.gmra.mxu0 %v1472
    %v1788 = vpop.f32.mrf.mxu0
    %v1789 = vadd.f32 0.0, %v1788
    %v1790 = vpop.f32.mrf.mxu0
    %v1791 = vadd.f32 0.0, %v1790
    %v1792 = vpop.f32.mrf.mxu0
    %v1793 = vadd.f32 0.0, %v1792
    %v1794 = vpop.f32.mrf.mxu0
    %v1795 = vadd.f32 0.0, %v1794
    %1796 = vdwg.mxu0
    %v1813 = vunpack.c.l.b16 %v1475
    %v1814 = vunpack.c.h.b16 %v1475
    %v1815 = vunpack.c.l.b16 %v1476
    %v1816 = vunpack.c.h.b16 %v1476
    %v1817 = vunpack.c.l.b16 %v1477
    %v1818 = vunpack.c.h.b16 %v1477
    %v1819 = vunpack.c.l.b16 %v1478
    %v1820 = vunpack.c.h.b16 %v1478
    %v1821 = vunpack.c.l.b16 %v1479
    %v1822 = vunpack.c.h.b16 %v1479
    %v1823 = vunpack.c.l.b16 %v1480
    %v1824 = vunpack.c.h.b16 %v1480
    %v1825 = vunpack.c.l.b16 %v1481
    %v1826 = vunpack.c.h.b16 %v1481
    %v1827 = vunpack.c.l.b16 %v1482
    %v1828 = vunpack.c.h.b16 %v1482
    %v1829 = vunpack.c.l.b16 %v1483
    %v1830 = vunpack.c.h.b16 %v1483
    %v1831 = vunpack.c.l.b16 %v1484
    %v1832 = vunpack.c.h.b16 %v1484
    %v1833 = vunpack.c.l.b16 %v1485
    %v1834 = vunpack.c.h.b16 %v1485
    %v1835 = vunpack.c.l.b16 %v1486
    %v1836 = vunpack.c.h.b16 %v1486
    %v1837 = vunpack.c.l.b16 %v1487
    %v1838 = vunpack.c.h.b16 %v1487
    %v1839 = vunpack.c.l.b16 %v1488
    %v1840 = vunpack.c.h.b16 %v1488
    %v1841 = vunpack.c.l.b16 %v1489
    %v1842 = vunpack.c.h.b16 %v1489
    %v1843 = vunpack.c.l.b16 %v1490
    %v1844 = vunpack.c.h.b16 %v1490
    %v1845 = vpack.c.b16 %v1815, %v1813
    %v1846 = vpack.c.b16 %v1816, %v1814
    %v1847 = vpack.c.b16 %v1819, %v1817
    %v1848 = vpack.c.b16 %v1820, %v1818
    %v1849 = vpack.c.b16 %v1823, %v1821
    %v1850 = vpack.c.b16 %v1824, %v1822
    %v1851 = vpack.c.b16 %v1827, %v1825
    %v1852 = vpack.c.b16 %v1828, %v1826
    %v1853 = vpack.c.b16 %v1831, %v1829
    %v1854 = vpack.c.b16 %v1832, %v1830
    %v1855 = vpack.c.b16 %v1835, %v1833
    %v1856 = vpack.c.b16 %v1836, %v1834
    %v1857 = vpack.c.b16 %v1839, %v1837
    %v1858 = vpack.c.b16 %v1840, %v1838
    %v1859 = vpack.c.b16 %v1843, %v1841
    %v1860 = vpack.c.b16 %v1844, %v1842
    %1877 = vmatprep.subr.bf16.mxu0 %v1860
    %1878 = vmatpush1.bf16.msra.mxu0 %v1859
    %1879 = vmatprep.subr.bf16.mxu0 %v1858
    %1880 = vmatpush1.bf16.msra.mxu0 %v1857
    %1881 = vmatprep.subr.bf16.mxu0 %v1856
    %1882 = vmatpush1.bf16.msra.mxu0 %v1855
    %1883 = vmatprep.subr.bf16.mxu0 %v1854
    %1884 = vmatpush1.bf16.msra.mxu0 %v1853
    %1885 = vmatprep.subr.bf16.mxu0 %v1852
    %1886 = vmatpush1.bf16.msra.mxu0 %v1851
    %1887 = vmatprep.subr.bf16.mxu0 %v1850
    %1888 = vmatpush1.bf16.msra.mxu0 %v1849
    %1889 = vmatprep.subr.bf16.mxu0 %v1848
    %1890 = vmatpush1.bf16.msra.mxu0 %v1847
    %1891 = vmatprep.subr.bf16.mxu0 %v1846
    %1892 = vmatpush1.bf16.msra.mxu0 %v1845
    %1893 = vmatprep.subr.bf16.mxu0 0
    %1894 = vmatpush2.bf16.msra.mxu0 0
    %1895 = vmatprep.subr.bf16.mxu0 0
    %1896 = vmatpush2.bf16.msra.mxu0 0
    %1897 = vmatprep.subr.bf16.mxu0 0
    %1898 = vmatpush2.bf16.msra.mxu0 0
    %1899 = vmatprep.subr.bf16.mxu0 0
    %1900 = vmatpush2.bf16.msra.mxu0 0
    %1901 = vmatprep.subr.bf16.mxu0 0
    %1902 = vmatpush2.bf16.msra.mxu0 0
    %1903 = vmatprep.subr.bf16.mxu0 0
    %1904 = vmatpush2.bf16.msra.mxu0 0
    %1905 = vmatprep.subr.bf16.mxu0 0
    %1906 = vmatpush2.bf16.msra.mxu0 0
    %1907 = vmatprep.subr.bf16.mxu0 0
    %1908 = vmatpush2.bf16.msra.mxu0 0
    %1909 = vmatprep.mubr.bf16.mxu0 0
    %1910 = vmatmul.mubr.bf16.gmra.mxu0 %v117
    %v1911 = vpop.f32.mrf.mxu0
    %v1912 = vadd.f32 %v1719, %v1911
    %v1913 = vpop.f32.mrf.mxu0
    %v1914 = vadd.f32 %v1721, %v1913
    %v1915 = vpop.f32.mrf.mxu0
    %v1916 = vadd.f32 %v1723, %v1915
    %v1917 = vpop.f32.mrf.mxu0
    %v1918 = vadd.f32 %v1725, %v1917
    %1919 = vmatprep.mubr.bf16.mxu0 0
    %1920 = vmatmul.mubr.bf16.gmra.mxu0 %v118
    %v1921 = vpop.f32.mrf.mxu0
    %v1922 = vadd.f32 %v1729, %v1921
    %v1923 = vpop.f32.mrf.mxu0
    %v1924 = vadd.f32 %v1731, %v1923
    %v1925 = vpop.f32.mrf.mxu0
    %v1926 = vadd.f32 %v1733, %v1925
    %v1927 = vpop.f32.mrf.mxu0
    %v1928 = vadd.f32 %v1735, %v1927
    %1929 = vmatprep.mubr.bf16.mxu0 0
    %1930 = vmatmul.mubr.bf16.gmra.mxu0 %v119
    %v1931 = vpop.f32.mrf.mxu0
    %v1932 = vadd.f32 %v1739, %v1931
    %v1933 = vpop.f32.mrf.mxu0
    %v1934 = vadd.f32 %v1741, %v1933
    %v1935 = vpop.f32.mrf.mxu0
    %v1936 = vadd.f32 %v1743, %v1935
    %v1937 = vpop.f32.mrf.mxu0
    %v1938 = vadd.f32 %v1745, %v1937
    %1939 = vmatprep.mubr.bf16.mxu0 0
    %1940 = vmatmul.mubr.bf16.gmra.mxu0 %v120
    %v1941 = vpop.f32.mrf.mxu0
    %v1942 = vadd.f32 %v1749, %v1941
    %v1943 = vpop.f32.mrf.mxu0
    %v1944 = vadd.f32 %v1751, %v1943
    %v1945 = vpop.f32.mrf.mxu0
    %v1946 = vadd.f32 %v1753, %v1945
    %v1947 = vpop.f32.mrf.mxu0
    %v1948 = vadd.f32 %v1755, %v1947
    %1949 = vmatprep.mubr.bf16.mxu0 0
    %1950 = vmatmul.mubr.bf16.gmra.mxu0 %v121
    %v1951 = vpop.f32.mrf.mxu0
    %v1952 = vadd.f32 %v1759, %v1951
    %v1953 = vpop.f32.mrf.mxu0
    %v1954 = vadd.f32 %v1761, %v1953
    %v1955 = vpop.f32.mrf.mxu0
    %v1956 = vadd.f32 %v1763, %v1955
    %v1957 = vpop.f32.mrf.mxu0
    %v1958 = vadd.f32 %v1765, %v1957
    %1959 = vmatprep.mubr.bf16.mxu0 0
    %1960 = vmatmul.mubr.bf16.gmra.mxu0 %v122
    %v1961 = vpop.f32.mrf.mxu0
    %v1962 = vadd.f32 %v1769, %v1961
    %v1963 = vpop.f32.mrf.mxu0
    %v1964 = vadd.f32 %v1771, %v1963
    %v1965 = vpop.f32.mrf.mxu0
    %v1966 = vadd.f32 %v1773, %v1965
    %v1967 = vpop.f32.mrf.mxu0
    %v1968 = vadd.f32 %v1775, %v1967
    %1969 = vmatprep.mubr.bf16.mxu0 0
    %1970 = vmatmul.mubr.bf16.gmra.mxu0 %v123
    %v1971 = vpop.f32.mrf.mxu0
    %v1972 = vadd.f32 %v1779, %v1971
    %v1973 = vpop.f32.mrf.mxu0
    %v1974 = vadd.f32 %v1781, %v1973
    %v1975 = vpop.f32.mrf.mxu0
    %v1976 = vadd.f32 %v1783, %v1975
    %v1977 = vpop.f32.mrf.mxu0
    %v1978 = vadd.f32 %v1785, %v1977
    %1979 = vmatprep.mubr.bf16.mxu0 0
    %1980 = vmatmul.mubr.bf16.gmra.mxu0 %v124
    %v1981 = vpop.f32.mrf.mxu0
    %v1982 = vadd.f32 %v1789, %v1981
    %v1983 = vpop.f32.mrf.mxu0
    %v1984 = vadd.f32 %v1791, %v1983
    %v1985 = vpop.f32.mrf.mxu0
    %v1986 = vadd.f32 %v1793, %v1985
    %v1987 = vpop.f32.mrf.mxu0
    %v1988 = vadd.f32 %v1795, %v1987
    %1989 = vdwg.mxu0
    %s1990 = scalar_lea.vmem %s4, 8
    %v1991 = vld [vmem:[%s1990] sm:$0x3]
    %v1993 = vlaneseq
    %v1994 = vshrl.u32 %v1993, 7
    %v1995 = vsub.s32 0, %v1994
    %v1996 = vrot.slane %v1991, %v1995
    %v1997 = vlaneseq
    %v1998 = vshrl.u32 %v1997, 7
    %v1999 = vsub.s32 1, %v1998
    %v2000 = vrot.slane %v1991, %v1999
    %v2003 = vadd.f32 %v1912, %v1996
    %v2004 = vadd.f32 %v1914, %v2000
    %v2005 = vadd.f32 %v1916, %v1996
    %v2006 = vadd.f32 %v1918, %v2000
    %v2007 = vadd.f32 %v1922, %v1996
    %v2008 = vadd.f32 %v1924, %v2000
    %v2009 = vadd.f32 %v1926, %v1996
    %v2010 = vadd.f32 %v1928, %v2000
    %v2011 = vadd.f32 %v1932, %v1996
    %v2012 = vadd.f32 %v1934, %v2000
    %v2013 = vadd.f32 %v1936, %v1996
    %v2014 = vadd.f32 %v1938, %v2000
    %v2015 = vadd.f32 %v1942, %v1996
    %v2016 = vadd.f32 %v1944, %v2000
    %v2017 = vadd.f32 %v1946, %v1996
    %v2018 = vadd.f32 %v1948, %v2000
    %v2019 = vadd.f32 %v1952, %v1996
    %v2020 = vadd.f32 %v1954, %v2000
    %v2021 = vadd.f32 %v1956, %v1996
    %v2022 = vadd.f32 %v1958, %v2000
    %v2023 = vadd.f32 %v1962, %v1996
    %v2024 = vadd.f32 %v1964, %v2000
    %v2025 = vadd.f32 %v1966, %v1996
    %v2026 = vadd.f32 %v1968, %v2000
    %v2027 = vadd.f32 %v1972, %v1996
    %v2028 = vadd.f32 %v1974, %v2000
    %v2029 = vadd.f32 %v1976, %v1996
    %v2030 = vadd.f32 %v1978, %v2000
    %v2031 = vadd.f32 %v1982, %v1996
    %v2032 = vadd.f32 %v1984, %v2000
    %v2033 = vadd.f32 %v1986, %v1996
    %v2034 = vadd.f32 %v1988, %v2000
    %v2035 = vmax.f32 %v2003, 0.0
    %v2036 = vmax.f32 %v2004, 0.0
    %v2037 = vmax.f32 %v2005, 0.0
    %v2038 = vmax.f32 %v2006, 0.0
    %v2039 = vmax.f32 %v2007, 0.0
    %v2040 = vmax.f32 %v2008, 0.0
    %v2041 = vmax.f32 %v2009, 0.0
    %v2042 = vmax.f32 %v2010, 0.0
    %v2043 = vmax.f32 %v2011, 0.0
    %v2044 = vmax.f32 %v2012, 0.0
    %v2045 = vmax.f32 %v2013, 0.0
    %v2046 = vmax.f32 %v2014, 0.0
    %v2047 = vmax.f32 %v2015, 0.0
    %v2048 = vmax.f32 %v2016, 0.0
    %v2049 = vmax.f32 %v2017, 0.0
    %v2050 = vmax.f32 %v2018, 0.0
    %v2051 = vmax.f32 %v2019, 0.0
    %v2052 = vmax.f32 %v2020, 0.0
    %v2053 = vmax.f32 %v2021, 0.0
    %v2054 = vmax.f32 %v2022, 0.0
    %v2055 = vmax.f32 %v2023, 0.0
    %v2056 = vmax.f32 %v2024, 0.0
    %v2057 = vmax.f32 %v2025, 0.0
    %v2058 = vmax.f32 %v2026, 0.0
    %v2059 = vmax.f32 %v2027, 0.0
    %v2060 = vmax.f32 %v2028, 0.0
    %v2061 = vmax.f32 %v2029, 0.0
    %v2062 = vmax.f32 %v2030, 0.0
    %v2063 = vmax.f32 %v2031, 0.0
    %v2064 = vmax.f32 %v2032, 0.0
    %v2065 = vmax.f32 %v2033, 0.0
    %v2066 = vmax.f32 %v2034, 0.0
    %v2067 = vpack.c.bf16 %v2037, %v2035
    %v2068 = vpack.c.bf16 %v2038, %v2036
    %v2069 = vpack.c.bf16 %v2041, %v2039
    %v2070 = vpack.c.bf16 %v2042, %v2040
    %v2071 = vpack.c.bf16 %v2045, %v2043
    %v2072 = vpack.c.bf16 %v2046, %v2044
    %v2073 = vpack.c.bf16 %v2049, %v2047
    %v2074 = vpack.c.bf16 %v2050, %v2048
    %v2075 = vpack.c.bf16 %v2053, %v2051
    %v2076 = vpack.c.bf16 %v2054, %v2052
    %v2077 = vpack.c.bf16 %v2057, %v2055
    %v2078 = vpack.c.bf16 %v2058, %v2056
    %v2079 = vpack.c.bf16 %v2061, %v2059
    %v2080 = vpack.c.bf16 %v2062, %v2060
    %v2081 = vpack.c.bf16 %v2065, %v2063
    %v2082 = vpack.c.bf16 %v2066, %v2064
    %s2083 = scalar_lea.vmem [#allocation2], 1024
    %v2084 = vld [vmem:[%s2083] sm:$0xff]
    %v2085 = vld [vmem:[%s2083 + $0x8] sm:$0xff]
    %v2086 = vld [vmem:[%s2083 + $0x10] sm:$0xff]
    %v2087 = vld [vmem:[%s2083 + $0x18] sm:$0xff]
    %v2088 = vld [vmem:[%s2083 + $0x20] sm:$0xff]
    %v2089 = vld [vmem:[%s2083 + $0x28] sm:$0xff]
    %v2090 = vld [vmem:[%s2083 + $0x30] sm:$0xff]
    %v2091 = vld [vmem:[%s2083 + $0x38] sm:$0xff]
    %v2092 = vld [vmem:[%s2083 + $0x40] sm:$0xff]
    %v2093 = vld [vmem:[%s2083 + $0x48] sm:$0xff]
    %v2094 = vld [vmem:[%s2083 + $0x50] sm:$0xff]
    %v2095 = vld [vmem:[%s2083 + $0x58] sm:$0xff]
    %v2096 = vld [vmem:[%s2083 + $0x60] sm:$0xff]
    %v2097 = vld [vmem:[%s2083 + $0x68] sm:$0xff]
    %v2098 = vld [vmem:[%s2083 + $0x70] sm:$0xff]
    %v2099 = vld [vmem:[%s2083 + $0x78] sm:$0xff]
    %v2100 = vld [vmem:[%s2083 + $0x80] sm:$0xff]
    %v2101 = vld [vmem:[%s2083 + $0x88] sm:$0xff]
    %v2102 = vld [vmem:[%s2083 + $0x90] sm:$0xff]
    %v2103 = vld [vmem:[%s2083 + $0x98] sm:$0xff]
    %v2104 = vld [vmem:[%s2083 + $0xa0] sm:$0xff]
    %v2105 = vld [vmem:[%s2083 + $0xa8] sm:$0xff]
    %v2106 = vld [vmem:[%s2083 + $0xb0] sm:$0xff]
    %v2107 = vld [vmem:[%s2083 + $0xb8] sm:$0xff]
    %v2108 = vld [vmem:[%s2083 + $0xc0] sm:$0xff]
    %v2109 = vld [vmem:[%s2083 + $0xc8] sm:$0xff]
    %v2110 = vld [vmem:[%s2083 + $0xd0] sm:$0xff]
    %v2111 = vld [vmem:[%s2083 + $0xd8] sm:$0xff]
    %v2112 = vld [vmem:[%s2083 + $0xe0] sm:$0xff]
    %v2113 = vld [vmem:[%s2083 + $0xe8] sm:$0xff]
    %v2114 = vld [vmem:[%s2083 + $0xf0] sm:$0xff]
    %v2115 = vld [vmem:[%s2083 + $0xf8] sm:$0xff]
    %s2116 = scalar_lea.vmem %s4, 10
    %v2117 = vld [vmem:[%s2116] sm:$0x3]
    %v2119 = vlaneseq
    %v2120 = vshrl.u32 %v2119, 7
    %v2121 = vsub.s32 0, %v2120
    %v2122 = vrot.slane %v2117, %v2121
    %v2123 = vlaneseq
    %v2124 = vshrl.u32 %v2123, 7
    %v2125 = vsub.s32 1, %v2124
    %v2126 = vrot.slane %v2117, %v2125
    %v2161 = vunpack.c.l.b16 %v2084
    %v2162 = vunpack.c.h.b16 %v2084
    %v2163 = vunpack.c.l.b16 %v2085
    %v2164 = vunpack.c.h.b16 %v2085
    %v2165 = vunpack.c.l.b16 %v2086
    %v2166 = vunpack.c.h.b16 %v2086
    %v2167 = vunpack.c.l.b16 %v2087
    %v2168 = vunpack.c.h.b16 %v2087
    %v2169 = vunpack.c.l.b16 %v2088
    %v2170 = vunpack.c.h.b16 %v2088
    %v2171 = vunpack.c.l.b16 %v2089
    %v2172 = vunpack.c.h.b16 %v2089
    %v2173 = vunpack.c.l.b16 %v2090
    %v2174 = vunpack.c.h.b16 %v2090
    %v2175 = vunpack.c.l.b16 %v2091
    %v2176 = vunpack.c.h.b16 %v2091
    %v2177 = vunpack.c.l.b16 %v2092
    %v2178 = vunpack.c.h.b16 %v2092
    %v2179 = vunpack.c.l.b16 %v2093
    %v2180 = vunpack.c.h.b16 %v2093
    %v2181 = vunpack.c.l.b16 %v2094
    %v2182 = vunpack.c.h.b16 %v2094
    %v2183 = vunpack.c.l.b16 %v2095
    %v2184 = vunpack.c.h.b16 %v2095
    %v2185 = vunpack.c.l.b16 %v2096
    %v2186 = vunpack.c.h.b16 %v2096
    %v2187 = vunpack.c.l.b16 %v2097
    %v2188 = vunpack.c.h.b16 %v2097
    %v2189 = vunpack.c.l.b16 %v2098
    %v2190 = vunpack.c.h.b16 %v2098
    %v2191 = vunpack.c.l.b16 %v2099
    %v2192 = vunpack.c.h.b16 %v2099
    %v2193 = vunpack.c.l.b16 %v2100
    %v2194 = vunpack.c.h.b16 %v2100
    %v2195 = vunpack.c.l.b16 %v2101
    %v2196 = vunpack.c.h.b16 %v2101
    %v2197 = vunpack.c.l.b16 %v2102
    %v2198 = vunpack.c.h.b16 %v2102
    %v2199 = vunpack.c.l.b16 %v2103
    %v2200 = vunpack.c.h.b16 %v2103
    %v2201 = vunpack.c.l.b16 %v2104
    %v2202 = vunpack.c.h.b16 %v2104
    %v2203 = vunpack.c.l.b16 %v2105
    %v2204 = vunpack.c.h.b16 %v2105
    %v2205 = vunpack.c.l.b16 %v2106
    %v2206 = vunpack.c.h.b16 %v2106
    %v2207 = vunpack.c.l.b16 %v2107
    %v2208 = vunpack.c.h.b16 %v2107
    %v2209 = vunpack.c.l.b16 %v2108
    %v2210 = vunpack.c.h.b16 %v2108
    %v2211 = vunpack.c.l.b16 %v2109
    %v2212 = vunpack.c.h.b16 %v2109
    %v2213 = vunpack.c.l.b16 %v2110
    %v2214 = vunpack.c.h.b16 %v2110
    %v2215 = vunpack.c.l.b16 %v2111
    %v2216 = vunpack.c.h.b16 %v2111
    %v2217 = vunpack.c.l.b16 %v2112
    %v2218 = vunpack.c.h.b16 %v2112
    %v2219 = vunpack.c.l.b16 %v2113
    %v2220 = vunpack.c.h.b16 %v2113
    %v2221 = vunpack.c.l.b16 %v2114
    %v2222 = vunpack.c.h.b16 %v2114
    %v2223 = vunpack.c.l.b16 %v2115
    %v2224 = vunpack.c.h.b16 %v2115
    %v2225 = vpack.c.b16 %v2163, %v2161
    %v2226 = vpack.c.b16 %v2164, %v2162
    %v2227 = vpack.c.b16 %v2167, %v2165
    %v2228 = vpack.c.b16 %v2168, %v2166
    %v2229 = vpack.c.b16 %v2171, %v2169
    %v2230 = vpack.c.b16 %v2172, %v2170
    %v2231 = vpack.c.b16 %v2175, %v2173
    %v2232 = vpack.c.b16 %v2176, %v2174
    %v2233 = vpack.c.b16 %v2179, %v2177
    %v2234 = vpack.c.b16 %v2180, %v2178
    %v2235 = vpack.c.b16 %v2183, %v2181
    %v2236 = vpack.c.b16 %v2184, %v2182
    %v2237 = vpack.c.b16 %v2187, %v2185
    %v2238 = vpack.c.b16 %v2188, %v2186
    %v2239 = vpack.c.b16 %v2191, %v2189
    %v2240 = vpack.c.b16 %v2192, %v2190
    %v2241 = vpack.c.b16 %v2195, %v2193
    %v2242 = vpack.c.b16 %v2196, %v2194
    %v2243 = vpack.c.b16 %v2199, %v2197
    %v2244 = vpack.c.b16 %v2200, %v2198
    %v2245 = vpack.c.b16 %v2203, %v2201
    %v2246 = vpack.c.b16 %v2204, %v2202
    %v2247 = vpack.c.b16 %v2207, %v2205
    %v2248 = vpack.c.b16 %v2208, %v2206
    %v2249 = vpack.c.b16 %v2211, %v2209
    %v2250 = vpack.c.b16 %v2212, %v2210
    %v2251 = vpack.c.b16 %v2215, %v2213
    %v2252 = vpack.c.b16 %v2216, %v2214
    %v2253 = vpack.c.b16 %v2219, %v2217
    %v2254 = vpack.c.b16 %v2220, %v2218
    %v2255 = vpack.c.b16 %v2223, %v2221
    %v2256 = vpack.c.b16 %v2224, %v2222
    %2289 = vmatprep.subr.bf16.mxu0 %v2240
    %2290 = vmatpush1.bf16.msra.mxu0 %v2239
    %2291 = vmatprep.subr.bf16.mxu0 %v2238
    %2292 = vmatpush1.bf16.msra.mxu0 %v2237
    %2293 = vmatprep.subr.bf16.mxu0 %v2236
    %2294 = vmatpush1.bf16.msra.mxu0 %v2235
    %2295 = vmatprep.subr.bf16.mxu0 %v2234
    %2296 = vmatpush1.bf16.msra.mxu0 %v2233
    %2297 = vmatprep.subr.bf16.mxu0 %v2232
    %2298 = vmatpush1.bf16.msra.mxu0 %v2231
    %2299 = vmatprep.subr.bf16.mxu0 %v2230
    %2300 = vmatpush1.bf16.msra.mxu0 %v2229
    %2301 = vmatprep.subr.bf16.mxu0 %v2228
    %2302 = vmatpush1.bf16.msra.mxu0 %v2227
    %2303 = vmatprep.subr.bf16.mxu0 %v2226
    %2304 = vmatpush1.bf16.msra.mxu0 %v2225
    %2305 = vmatprep.subr.bf16.mxu0 %v2256
    %2306 = vmatpush2.bf16.msra.mxu0 %v2255
    %2307 = vmatprep.subr.bf16.mxu0 %v2254
    %2308 = vmatpush2.bf16.msra.mxu0 %v2253
    %2309 = vmatprep.subr.bf16.mxu0 %v2252
    %2310 = vmatpush2.bf16.msra.mxu0 %v2251
    %2311 = vmatprep.subr.bf16.mxu0 %v2250
    %2312 = vmatpush2.bf16.msra.mxu0 %v2249
    %2313 = vmatprep.subr.bf16.mxu0 %v2248
    %2314 = vmatpush2.bf16.msra.mxu0 %v2247
    %2315 = vmatprep.subr.bf16.mxu0 %v2246
    %2316 = vmatpush2.bf16.msra.mxu0 %v2245
    %2317 = vmatprep.subr.bf16.mxu0 %v2244
    %2318 = vmatpush2.bf16.msra.mxu0 %v2243
    %2319 = vmatprep.subr.bf16.mxu0 %v2242
    %2320 = vmatpush2.bf16.msra.mxu0 %v2241
    %2321 = vmatprep.mubr.bf16.mxu0 %v2068
    %2322 = vmatmul.mubr.bf16.gmra.mxu0 %v2067
    %v2323 = vpop.f32.mrf.mxu0
    %v2324 = vadd.f32 %v2122, %v2323
    %v2325 = vpop.f32.mrf.mxu0
    %v2326 = vadd.f32 %v2126, %v2325
    %v2327 = vpop.f32.mrf.mxu0
    %v2328 = vadd.f32 %v2122, %v2327
    %v2329 = vpop.f32.mrf.mxu0
    %v2330 = vadd.f32 %v2126, %v2329
    %2331 = vmatprep.mubr.bf16.mxu0 %v2070
    %2332 = vmatmul.mubr.bf16.gmra.mxu0 %v2069
    %v2333 = vpop.f32.mrf.mxu0
    %v2334 = vadd.f32 %v2122, %v2333
    %v2335 = vpop.f32.mrf.mxu0
    %v2336 = vadd.f32 %v2126, %v2335
    %v2337 = vpop.f32.mrf.mxu0
    %v2338 = vadd.f32 %v2122, %v2337
    %v2339 = vpop.f32.mrf.mxu0
    %v2340 = vadd.f32 %v2126, %v2339
    %2341 = vmatprep.mubr.bf16.mxu0 %v2072
    %2342 = vmatmul.mubr.bf16.gmra.mxu0 %v2071
    %v2343 = vpop.f32.mrf.mxu0
    %v2344 = vadd.f32 %v2122, %v2343
    %v2345 = vpop.f32.mrf.mxu0
    %v2346 = vadd.f32 %v2126, %v2345
    %v2347 = vpop.f32.mrf.mxu0
    %v2348 = vadd.f32 %v2122, %v2347
    %v2349 = vpop.f32.mrf.mxu0
    %v2350 = vadd.f32 %v2126, %v2349
    %2351 = vmatprep.mubr.bf16.mxu0 %v2074
    %2352 = vmatmul.mubr.bf16.gmra.mxu0 %v2073
    %v2353 = vpop.f32.mrf.mxu0
    %v2354 = vadd.f32 %v2122, %v2353
    %v2355 = vpop.f32.mrf.mxu0
    %v2356 = vadd.f32 %v2126, %v2355
    %v2357 = vpop.f32.mrf.mxu0
    %v2358 = vadd.f32 %v2122, %v2357
    %v2359 = vpop.f32.mrf.mxu0
    %v2360 = vadd.f32 %v2126, %v2359
    %2361 = vmatprep.mubr.bf16.mxu0 %v2076
    %2362 = vmatmul.mubr.bf16.gmra.mxu0 %v2075
    %v2363 = vpop.f32.mrf.mxu0
    %v2364 = vadd.f32 %v2122, %v2363
    %v2365 = vpop.f32.mrf.mxu0
    %v2366 = vadd.f32 %v2126, %v2365
    %v2367 = vpop.f32.mrf.mxu0
    %v2368 = vadd.f32 %v2122, %v2367
    %v2369 = vpop.f32.mrf.mxu0
    %v2370 = vadd.f32 %v2126, %v2369
    %2371 = vmatprep.mubr.bf16.mxu0 %v2078
    %2372 = vmatmul.mubr.bf16.gmra.mxu0 %v2077
    %v2373 = vpop.f32.mrf.mxu0
    %v2374 = vadd.f32 %v2122, %v2373
    %v2375 = vpop.f32.mrf.mxu0
    %v2376 = vadd.f32 %v2126, %v2375
    %v2377 = vpop.f32.mrf.mxu0
    %v2378 = vadd.f32 %v2122, %v2377
    %v2379 = vpop.f32.mrf.mxu0
    %v2380 = vadd.f32 %v2126, %v2379
    %2381 = vmatprep.mubr.bf16.mxu0 %v2080
    %2382 = vmatmul.mubr.bf16.gmra.mxu0 %v2079
    %v2383 = vpop.f32.mrf.mxu0
    %v2384 = vadd.f32 %v2122, %v2383
    %v2385 = vpop.f32.mrf.mxu0
    %v2386 = vadd.f32 %v2126, %v2385
    %v2387 = vpop.f32.mrf.mxu0
    %v2388 = vadd.f32 %v2122, %v2387
    %v2389 = vpop.f32.mrf.mxu0
    %v2390 = vadd.f32 %v2126, %v2389
    %2391 = vmatprep.mubr.bf16.mxu0 %v2082
    %2392 = vmatmul.mubr.bf16.gmra.mxu0 %v2081
    %v2393 = vpop.f32.mrf.mxu0
    %v2394 = vadd.f32 %v2122, %v2393
    %v2395 = vpop.f32.mrf.mxu0
    %v2396 = vadd.f32 %v2126, %v2395
    %v2397 = vpop.f32.mrf.mxu0
    %v2398 = vadd.f32 %v2122, %v2397
    %v2399 = vpop.f32.mrf.mxu0
    %v2400 = vadd.f32 %v2126, %v2399
    %2401 = vdwg.mxu0
    %v2402 = vmax.f32 %v2324, 0.0
    %v2403 = vmax.f32 %v2326, 0.0
    %v2404 = vmax.f32 %v2328, 0.0
    %v2405 = vmax.f32 %v2330, 0.0
    %v2406 = vmax.f32 %v2334, 0.0
    %v2407 = vmax.f32 %v2336, 0.0
    %v2408 = vmax.f32 %v2338, 0.0
    %v2409 = vmax.f32 %v2340, 0.0
    %v2410 = vmax.f32 %v2344, 0.0
    %v2411 = vmax.f32 %v2346, 0.0
    %v2412 = vmax.f32 %v2348, 0.0
    %v2413 = vmax.f32 %v2350, 0.0
    %v2414 = vmax.f32 %v2354, 0.0
    %v2415 = vmax.f32 %v2356, 0.0
    %v2416 = vmax.f32 %v2358, 0.0
    %v2417 = vmax.f32 %v2360, 0.0
    %v2418 = vmax.f32 %v2364, 0.0
    %v2419 = vmax.f32 %v2366, 0.0
    %v2420 = vmax.f32 %v2368, 0.0
    %v2421 = vmax.f32 %v2370, 0.0
    %v2422 = vmax.f32 %v2374, 0.0
    %v2423 = vmax.f32 %v2376, 0.0
    %v2424 = vmax.f32 %v2378, 0.0
    %v2425 = vmax.f32 %v2380, 0.0
    %v2426 = vmax.f32 %v2384, 0.0
    %v2427 = vmax.f32 %v2386, 0.0
    %v2428 = vmax.f32 %v2388, 0.0
    %v2429 = vmax.f32 %v2390, 0.0
    %v2430 = vmax.f32 %v2394, 0.0
    %v2431 = vmax.f32 %v2396, 0.0
    %v2432 = vmax.f32 %v2398, 0.0
    %v2433 = vmax.f32 %v2400, 0.0
    %v2434 = vpack.c.bf16 %v2404, %v2402
    %v2435 = vpack.c.bf16 %v2405, %v2403
    %v2436 = vpack.c.bf16 %v2408, %v2406
    %v2437 = vpack.c.bf16 %v2409, %v2407
    %v2438 = vpack.c.bf16 %v2412, %v2410
    %v2439 = vpack.c.bf16 %v2413, %v2411
    %v2440 = vpack.c.bf16 %v2416, %v2414
    %v2441 = vpack.c.bf16 %v2417, %v2415
    %v2442 = vpack.c.bf16 %v2420, %v2418
    %v2443 = vpack.c.bf16 %v2421, %v2419
    %v2444 = vpack.c.bf16 %v2424, %v2422
    %v2445 = vpack.c.bf16 %v2425, %v2423
    %v2446 = vpack.c.bf16 %v2428, %v2426
    %v2447 = vpack.c.bf16 %v2429, %v2427
    %v2448 = vpack.c.bf16 %v2432, %v2430
    %v2449 = vpack.c.bf16 %v2433, %v2431
    %v2450 = vld [vmem:[%s5] sm:$0xf]
    %v2451 = vld [vmem:[%s5 + $0x4] sm:$0xf]
    %v2452 = vld [vmem:[%s5 + $0x8] sm:$0xf]
    %v2453 = vld [vmem:[%s5 + $0xc] sm:$0xf]
    %v2454 = vld [vmem:[%s5 + $0x10] sm:$0xf]
    %v2455 = vld [vmem:[%s5 + $0x14] sm:$0xf]
    %v2456 = vld [vmem:[%s5 + $0x18] sm:$0xf]
    %v2457 = vld [vmem:[%s5 + $0x1c] sm:$0xf]
    %v2458 = vld [vmem:[%s5 + $0x20] sm:$0xf]
    %v2459 = vld [vmem:[%s5 + $0x24] sm:$0xf]
    %v2460 = vld [vmem:[%s5 + $0x28] sm:$0xf]
    %v2461 = vld [vmem:[%s5 + $0x2c] sm:$0xf]
    %v2462 = vld [vmem:[%s5 + $0x30] sm:$0xf]
    %v2463 = vld [vmem:[%s5 + $0x34] sm:$0xf]
    %v2464 = vld [vmem:[%s5 + $0x38] sm:$0xf]
    %v2465 = vld [vmem:[%s5 + $0x3c] sm:$0xf]
    %v2466 = vld [vmem:[%s5 + $0x40] sm:$0xf]
    %v2467 = vld [vmem:[%s5 + $0x44] sm:$0xf]
    %v2468 = vld [vmem:[%s5 + $0x48] sm:$0xf]
    %v2469 = vld [vmem:[%s5 + $0x4c] sm:$0xf]
    %v2470 = vld [vmem:[%s5 + $0x50] sm:$0xf]
    %v2471 = vld [vmem:[%s5 + $0x54] sm:$0xf]
    %v2472 = vld [vmem:[%s5 + $0x58] sm:$0xf]
    %v2473 = vld [vmem:[%s5 + $0x5c] sm:$0xf]
    %v2474 = vld [vmem:[%s5 + $0x60] sm:$0xf]
    %v2475 = vld [vmem:[%s5 + $0x64] sm:$0xf]
    %v2476 = vld [vmem:[%s5 + $0x68] sm:$0xf]
    %v2477 = vld [vmem:[%s5 + $0x6c] sm:$0xf]
    %v2478 = vld [vmem:[%s5 + $0x70] sm:$0xf]
    %v2479 = vld [vmem:[%s5 + $0x74] sm:$0xf]
    %v2480 = vld [vmem:[%s5 + $0x78] sm:$0xf]
    %v2481 = vld [vmem:[%s5 + $0x7c] sm:$0xf]
    %v2482 = vld [vmem:[%s6] sm:$0x1]
    %v2484 = vlaneseq
    %v2485 = vshrl.u32 %v2484, 7
    %v2486 = vsub.s32 0, %v2485
    %v2487 = vrot.slane %v2482, %v2486
    %v2521 = vunpack.c.l.b16 %v2450
    %v2522 = vunpack.c.l.b16 %v2451
    %v2523 = vunpack.c.l.b16 %v2452
    %v2524 = vunpack.c.l.b16 %v2453
    %v2525 = vunpack.c.l.b16 %v2454
    %v2526 = vunpack.c.l.b16 %v2455
    %v2527 = vunpack.c.l.b16 %v2456
    %v2528 = vunpack.c.l.b16 %v2457
    %v2529 = vunpack.c.l.b16 %v2458
    %v2530 = vunpack.c.l.b16 %v2459
    %v2531 = vunpack.c.l.b16 %v2460
    %v2532 = vunpack.c.l.b16 %v2461
    %v2533 = vunpack.c.l.b16 %v2462
    %v2534 = vunpack.c.l.b16 %v2463
    %v2535 = vunpack.c.l.b16 %v2464
    %v2536 = vunpack.c.l.b16 %v2465
    %v2537 = vunpack.c.l.b16 %v2466
    %v2538 = vunpack.c.l.b16 %v2467
    %v2539 = vunpack.c.l.b16 %v2468
    %v2540 = vunpack.c.l.b16 %v2469
    %v2541 = vunpack.c.l.b16 %v2470
    %v2542 = vunpack.c.l.b16 %v2471
    %v2543 = vunpack.c.l.b16 %v2472
    %v2544 = vunpack.c.l.b16 %v2473
    %v2545 = vunpack.c.l.b16 %v2474
    %v2546 = vunpack.c.l.b16 %v2475
    %v2547 = vunpack.c.l.b16 %v2476
    %v2548 = vunpack.c.l.b16 %v2477
    %v2549 = vunpack.c.l.b16 %v2478
    %v2550 = vunpack.c.l.b16 %v2479
    %v2551 = vunpack.c.l.b16 %v2480
    %v2552 = vunpack.c.l.b16 %v2481
    %v2553 = vpack.c.b16 %v2522, %v2521
    %v2554 = vpack.c.b16 %v2524, %v2523
    %v2555 = vpack.c.b16 %v2526, %v2525
    %v2556 = vpack.c.b16 %v2528, %v2527
    %v2557 = vpack.c.b16 %v2530, %v2529
    %v2558 = vpack.c.b16 %v2532, %v2531
    %v2559 = vpack.c.b16 %v2534, %v2533
    %v2560 = vpack.c.b16 %v2536, %v2535
    %v2561 = vpack.c.b16 %v2538, %v2537
    %v2562 = vpack.c.b16 %v2540, %v2539
    %v2563 = vpack.c.b16 %v2542, %v2541
    %v2564 = vpack.c.b16 %v2544, %v2543
    %v2565 = vpack.c.b16 %v2546, %v2545
    %v2566 = vpack.c.b16 %v2548, %v2547
    %v2567 = vpack.c.b16 %v2550, %v2549
    %v2568 = vpack.c.b16 %v2552, %v2551
    %2585 = vmatprep.subr.bf16.mxu0 0
    %2586 = vmatpush1.bf16.msra.mxu0 %v2560
    %2587 = vmatprep.subr.bf16.mxu0 0
    %2588 = vmatpush1.bf16.msra.mxu0 %v2559
    %2589 = vmatprep.subr.bf16.mxu0 0
    %2590 = vmatpush1.bf16.msra.mxu0 %v2558
    %2591 = vmatprep.subr.bf16.mxu0 0
    %2592 = vmatpush1.bf16.msra.mxu0 %v2557
    %2593 = vmatprep.subr.bf16.mxu0 0
    %2594 = vmatpush1.bf16.msra.mxu0 %v2556
    %2595 = vmatprep.subr.bf16.mxu0 0
    %2596 = vmatpush1.bf16.msra.mxu0 %v2555
    %2597 = vmatprep.subr.bf16.mxu0 0
    %2598 = vmatpush1.bf16.msra.mxu0 %v2554
    %2599 = vmatprep.subr.bf16.mxu0 0
    %2600 = vmatpush1.bf16.msra.mxu0 %v2553
    %2601 = vmatprep.subr.bf16.mxu0 0
    %2602 = vmatpush2.bf16.msra.mxu0 %v2568
    %2603 = vmatprep.subr.bf16.mxu0 0
    %2604 = vmatpush2.bf16.msra.mxu0 %v2567
    %2605 = vmatprep.subr.bf16.mxu0 0
    %2606 = vmatpush2.bf16.msra.mxu0 %v2566
    %2607 = vmatprep.subr.bf16.mxu0 0
    %2608 = vmatpush2.bf16.msra.mxu0 %v2565
    %2609 = vmatprep.subr.bf16.mxu0 0
    %2610 = vmatpush2.bf16.msra.mxu0 %v2564
    %2611 = vmatprep.subr.bf16.mxu0 0
    %2612 = vmatpush2.bf16.msra.mxu0 %v2563
    %2613 = vmatprep.subr.bf16.mxu0 0
    %2614 = vmatpush2.bf16.msra.mxu0 %v2562
    %2615 = vmatprep.subr.bf16.mxu0 0
    %2616 = vmatpush2.bf16.msra.mxu0 %v2561
    %2617 = vmatprep.mubr.bf16.mxu0 %v2435
    %2618 = vmatmul.mubr.bf16.gmra.mxu0 %v2434
    %v2619 = vpop.f32.mrf.mxu0
    %v2620 = vadd.f32 %v2487, %v2619
    %v2621 = vpop.f32.mrf.mxu0
    %v2622 = vpop.f32.mrf.mxu0
    %v2623 = vadd.f32 %v2487, %v2622
    %v2624 = vpop.f32.mrf.mxu0
    %2625 = vmatprep.mubr.bf16.mxu0 %v2437
    %2626 = vmatmul.mubr.bf16.gmra.mxu0 %v2436
    %v2627 = vpop.f32.mrf.mxu0
    %v2628 = vadd.f32 %v2487, %v2627
    %v2629 = vpop.f32.mrf.mxu0
    %v2630 = vpop.f32.mrf.mxu0
    %v2631 = vadd.f32 %v2487, %v2630
    %v2632 = vpop.f32.mrf.mxu0
    %2633 = vmatprep.mubr.bf16.mxu0 %v2439
    %2634 = vmatmul.mubr.bf16.gmra.mxu0 %v2438
    %v2635 = vpop.f32.mrf.mxu0
    %v2636 = vadd.f32 %v2487, %v2635
    %v2637 = vpop.f32.mrf.mxu0
    %v2638 = vpop.f32.mrf.mxu0
    %v2639 = vadd.f32 %v2487, %v2638
    %v2640 = vpop.f32.mrf.mxu0
    %2641 = vmatprep.mubr.bf16.mxu0 %v2441
    %2642 = vmatmul.mubr.bf16.gmra.mxu0 %v2440
    %v2643 = vpop.f32.mrf.mxu0
    %v2644 = vadd.f32 %v2487, %v2643
    %v2645 = vpop.f32.mrf.mxu0
    %v2646 = vpop.f32.mrf.mxu0
    %v2647 = vadd.f32 %v2487, %v2646
    %v2648 = vpop.f32.mrf.mxu0
    %2649 = vmatprep.mubr.bf16.mxu0 %v2443
    %2650 = vmatmul.mubr.bf16.gmra.mxu0 %v2442
    %v2651 = vpop.f32.mrf.mxu0
    %v2652 = vadd.f32 %v2487, %v2651
    %v2653 = vpop.f32.mrf.mxu0
    %v2654 = vpop.f32.mrf.mxu0
    %v2655 = vadd.f32 %v2487, %v2654
    %v2656 = vpop.f32.mrf.mxu0
    %2657 = vmatprep.mubr.bf16.mxu0 %v2445
    %2658 = vmatmul.mubr.bf16.gmra.mxu0 %v2444
    %v2659 = vpop.f32.mrf.mxu0
    %v2660 = vadd.f32 %v2487, %v2659
    %v2661 = vpop.f32.mrf.mxu0
    %v2662 = vpop.f32.mrf.mxu0
    %v2663 = vadd.f32 %v2487, %v2662
    %v2664 = vpop.f32.mrf.mxu0
    %2665 = vmatprep.mubr.bf16.mxu0 %v2447
    %2666 = vmatmul.mubr.bf16.gmra.mxu0 %v2446
    %v2667 = vpop.f32.mrf.mxu0
    %v2668 = vadd.f32 %v2487, %v2667
    %v2669 = vpop.f32.mrf.mxu0
    %v2670 = vpop.f32.mrf.mxu0
    %v2671 = vadd.f32 %v2487, %v2670
    %v2672 = vpop.f32.mrf.mxu0
    %2673 = vmatprep.mubr.bf16.mxu0 %v2449
    %2674 = vmatmul.mubr.bf16.gmra.mxu0 %v2448
    %v2675 = vpop.f32.mrf.mxu0
    %v2676 = vadd.f32 %v2487, %v2675
    %v2677 = vpop.f32.mrf.mxu0
    %v2678 = vpop.f32.mrf.mxu0
    %v2679 = vadd.f32 %v2487, %v2678
    %v2680 = vpop.f32.mrf.mxu0
    %2681 = vdwg.mxu0
    %v2682 = vld [vmem:[%s1] sm:$0xff]
    %v2683 = vld [vmem:[%s1 + $0x8] sm:$0xff]
    %v2684 = vld [vmem:[%s1 + $0x10] sm:$0xff]
    %v2685 = vld [vmem:[%s1 + $0x18] sm:$0xff]
    %v2686 = vld [vmem:[%s1 + $0x20] sm:$0xff]
    %v2687 = vld [vmem:[%s1 + $0x28] sm:$0xff]
    %v2688 = vld [vmem:[%s1 + $0x30] sm:$0xff]
    %v2689 = vld [vmem:[%s1 + $0x38] sm:$0xff]
    %v2690 = vld [vmem:[%s1 + $0x40] sm:$0xff]
    %v2691 = vld [vmem:[%s1 + $0x48] sm:$0xff]
    %v2692 = vld [vmem:[%s1 + $0x50] sm:$0xff]
    %v2693 = vld [vmem:[%s1 + $0x58] sm:$0xff]
    %v2694 = vld [vmem:[%s1 + $0x60] sm:$0xff]
    %v2695 = vld [vmem:[%s1 + $0x68] sm:$0xff]
    %v2696 = vld [vmem:[%s1 + $0x70] sm:$0xff]
    %v2697 = vld [vmem:[%s1 + $0x78] sm:$0xff]
    %v2698 = vadd.f32 %v2682, %v2620
    %v2699 = vadd.f32 %v2683, %v2623
    %v2700 = vadd.f32 %v2684, %v2628
    %v2701 = vadd.f32 %v2685, %v2631
    %v2702 = vadd.f32 %v2686, %v2636
    %v2703 = vadd.f32 %v2687, %v2639
    %v2704 = vadd.f32 %v2688, %v2644
    %v2705 = vadd.f32 %v2689, %v2647
    %v2706 = vadd.f32 %v2690, %v2652
    %v2707 = vadd.f32 %v2691, %v2655
    %v2708 = vadd.f32 %v2692, %v2660
    %v2709 = vadd.f32 %v2693, %v2663
    %v2710 = vadd.f32 %v2694, %v2668
    %v2711 = vadd.f32 %v2695, %v2671
    %v2712 = vadd.f32 %v2696, %v2676
    %v2713 = vadd.f32 %v2697, %v2679
    %vm2714 = vcmask 23552
    %2715 = vst.msk [vmem:[%s7] sm:$0xff] %vm2714, %v2698
    %2716 = vst.msk [vmem:[%s7 + $0x8] sm:$0xff] %vm2714, %v2699
    %2717 = vst.msk [vmem:[%s7 + $0x10] sm:$0xff] %vm2714, %v2700
    %2718 = vst.msk [vmem:[%s7 + $0x18] sm:$0xff] %vm2714, %v2701
    %2719 = vst.msk [vmem:[%s7 + $0x20] sm:$0xff] %vm2714, %v2702
    %2720 = vst.msk [vmem:[%s7 + $0x28] sm:$0xff] %vm2714, %v2703
    %2721 = vst.msk [vmem:[%s7 + $0x30] sm:$0xff] %vm2714, %v2704
    %2722 = vst.msk [vmem:[%s7 + $0x38] sm:$0xff] %vm2714, %v2705
    %2723 = vst.msk [vmem:[%s7 + $0x40] sm:$0xff] %vm2714, %v2706
    %2724 = vst.msk [vmem:[%s7 + $0x48] sm:$0xff] %vm2714, %v2707
    %2725 = vst.msk [vmem:[%s7 + $0x50] sm:$0xff] %vm2714, %v2708
    %2726 = vst.msk [vmem:[%s7 + $0x58] sm:$0xff] %vm2714, %v2709
    %2727 = vst.msk [vmem:[%s7 + $0x60] sm:$0xff] %vm2714, %v2710
    %2728 = vst.msk [vmem:[%s7 + $0x68] sm:$0xff] %vm2714, %v2711
    %2729 = vst.msk [vmem:[%s7 + $0x70] sm:$0xff] %vm2714, %v2712
    %2730 = vst.msk [vmem:[%s7 + $0x78] sm:$0xff] %vm2714, %v2713
    // Predicated region
    $region34: #{dense_warp_forward.1} parent=1 // pred_check
      _
    $region35: #{dense_warp_forward.1} parent=1 // pred_check_branch
      %2732 = sbr.rel (0) target = $region37
    $region36: #{dense_warp_forward.1} parent=1 // pred_region
      _
    $region37: #{dense_warp_forward.1} parent=1 // pred_fallthru
      _
    // Predicated region
    $region38: #{dense_warp_forward.1} parent=1 // pred_check
      _
    $region39: #{dense_warp_forward.1} parent=1 // pred_check_branch
      %2734 = sbr.rel (0) target = $region41
    $region40: #{dense_warp_forward.1} parent=1 // pred_region
      _
    $region41: #{dense_warp_forward.1} parent=1 // pred_fallthru
      _
    %2735 = vsyncpa [#allocation3], 1

</llo_original>
